<compile_context>
chip_gen: v7x
topology: tpu7x:2x2x1
jax: 0.10.0
libtpu: 0.0.40
codegen_flags: <defaults>
</compile_context>

<pallas_src>
import math
from functools import partial

import jax
import jax.numpy as jnp
from jax.experimental import pallas as pl
from jax.experimental.pallas import tpu as pltpu


_ACT_DEF_GAIN = {"linear": 1.0, "lrelu": math.sqrt(2.0), "relu": math.sqrt(2.0)}


def _round_up(x, m):
    return (x + m - 1) // m * m


def _choose_tile_h(Ho, Wo, Wp, Cin, K, TCO, out_itemsize, budget=20 * 1024 * 1024):
    """Largest row-slab height whose working set fits a conservative VMEM budget."""
    KKC = K * K * Cin

    def vmem_use(th):
        thp = th + K - 1
        x_blk = thp * Wp * Cin * 2 * 2            # bf16 input slab, double-buffered
        o_blk = th * Wo * TCO * out_itemsize * 2  # output tile, double-buffered
        w_blk = KKC * TCO * 2 * 2                 # weight slab, double-buffered
        b_blk = TCO * 4 * 2
        patch = th * Wo * KKC * 2                 # in-kernel im2col patch (bf16)
        acc = th * Wo * TCO * 4                   # matmul result (f32)
        return x_blk + o_blk + w_blk + b_blk + patch + acc

    th = Ho
    while th > 1 and vmem_use(th) > budget:
        th = (th + 1) // 2
    return th


def _conv2d_bias_act_kernel(x_ref, w_ref, b_ref, o_ref, *, K, activation, act_gain, clamp):
    # x_ref: (1, tH+K-1, Wp, Cin)   bf16 input row slab (with halo), spatially pre-padded
    # w_ref: (K*K*Cin, TCO)         bf16 scaled weight slab (im2col layout, (kh,kw,ci) order)
    # b_ref: (1, TCO)               f32 bias slab
    # o_ref: (1, tH, Wo, TCO)       output tile
    _, tH, Wo, TCO = o_ref.shape
    Cin = x_ref.shape[-1]
    KKC = K * K * Cin

    # im2col: gather the K*K shifted windows once, concatenate along channels, and
    # do a single deep matmul (contraction depth K*K*Cin) on the MXU.
    cols = []
    for kh in range(K):          # static, compile-time kernel window
        for kw in range(K):
            cols.append(x_ref[0, kh:kh + tH, kw:kw + Wo, :])       # (tH, Wo, Cin)
    patch = jnp.concatenate(cols, axis=-1)                         # (tH, Wo, K*K*Cin)
    patch = patch.reshape(tH * Wo, KKC)

    acc = jnp.dot(patch, w_ref[...], preferred_element_type=jnp.float32)  # (tH*Wo, TCO) f32

    # bias_act epilogue (f32): act(x + b) * gain, optional clamp.
    acc = acc + b_ref[...].astype(jnp.float32)
    if activation == "linear":
        pass
    elif activation == "lrelu":
        acc = jnp.where(acc >= 0, acc, 0.2 * acc)
    elif activation == "relu":
        acc = jnp.maximum(acc, 0.0)
    else:
        raise NotImplementedError(activation)
    if act_gain != 1.0:
        acc = acc * act_gain
    if clamp is not None:
        acc = jnp.clip(acc, -clamp, clamp)

    o_ref[...] = acc.reshape(1, tH, Wo, TCO).astype(o_ref.dtype)


def conv2d_forward(x_nchw, weight, bias, *, activation="linear", gain=1.0,
                   activation_clamp=None, tile_h=None):
    """Forward of the Conv2d module (upsample=downsample=1), NCHW in / NCHW out.

    x_nchw : (N, Cin, H, W)       -- PyTorch NCHW layout
    weight : (Cout, Cin, K, K)    -- raw (unscaled) weight, like nn.Parameter
    bias   : (Cout,) or None
    """
    N, Cin, H, W = x_nchw.shape
    Cout, Cin_w, K, K2 = weight.shape
    assert Cin_w == Cin and K == K2
    pad = K // 2

    weight_gain = 1.0 / math.sqrt(Cin * K * K)
    act_gain = float(_ACT_DEF_GAIN[activation] * gain)
    clamp = float(activation_clamp * gain) if activation_clamp is not None else None

    Hp, Wp = H + 2 * pad, W + 2 * pad
    Ho, Wo = Hp - K + 1, Wp - K + 1
    out_dtype = x_nchw.dtype

    # ---- Parameters: scale (tiny array, cheap), im2col layout, pad Cout to 128 lanes, bf16.
    CO_pad = _round_up(Cout, 128)
    TCO = 256 if CO_pad % 256 == 0 else 128
    nCO = CO_pad // TCO
    w = (weight * weight_gain).astype(jnp.bfloat16)
    w = jnp.transpose(w, (2, 3, 1, 0)).reshape(K * K * Cin, Cout)   # (kh, kw, ci) -> rows
    w = jnp.pad(w, ((0, 0), (0, CO_pad - Cout)))
    b = bias if bias is not None else jnp.zeros((Cout,), jnp.float32)
    b = jnp.pad(b.astype(jnp.float32), (0, CO_pad - Cout)).reshape(1, CO_pad)

    # ---- Row-slab tiling along the output H axis.
    if tile_h is None:
        tH = _choose_tile_h(Ho, Wo, Wp, Cin, K, TCO, jnp.dtype(out_dtype).itemsize)
    else:
        tH = int(tile_h)
    tH = max(1, min(tH, Ho))
    nH = -(-Ho // tH)                 # cdiv
    Ho_pad = nH * tH
    tHp = tH + K - 1

    # ---- Activations: NHWC, bf16, spatial zero-pad (+ extra bottom rows so every slab is full),
    # then pre-slice overlapping row slabs (halo duplicated) so BlockSpecs stay non-overlapping.
    x = jnp.transpose(x_nchw, (0, 2, 3, 1)).astype(jnp.bfloat16)     # NHWC
    x = jnp.pad(x, ((0, 0), (pad, pad + Ho_pad - Ho), (pad, pad), (0, 0)))
    row_idx = (jnp.arange(nH) * tH)[:, None] + jnp.arange(tHp)[None, :]   # (nH, tHp)
    x_slabs = x[:, row_idx]                                          # (N, nH, tHp, Wp, Cin)
    x_slabs = x_slabs.reshape(N * nH, tHp, Wp, Cin)

    kernel = partial(_conv2d_bias_act_kernel, K=K, activation=activation,
                     act_gain=act_gain, clamp=clamp)

    out_nhwc = pl.pallas_call(
        kernel,
        out_shape=jax.ShapeDtypeStruct((N, Ho_pad, Wo, CO_pad), out_dtype),
        grid_spec=pltpu.PrefetchScalarGridSpec(
            num_scalar_prefetch=0,
            grid=(N, nCO, nH),
            in_specs=[
                pl.BlockSpec((1, tHp, Wp, Cin), lambda n, co, h: (n * nH + h, 0, 0, 0)),
                pl.BlockSpec((K * K * Cin, TCO), lambda n, co, h: (0, co)),
                pl.BlockSpec((1, TCO), lambda n, co, h: (0, co)),
            ],
            out_specs=pl.BlockSpec((1, tH, Wo, TCO), lambda n, co, h: (n, h, 0, co)),
        ),
        compiler_params=pltpu.CompilerParams(
            dimension_semantics=("parallel", "parallel", "parallel"),
            vmem_limit_bytes=32 * 1024 * 1024),
    )(x_slabs, w, b)

    out_nhwc = out_nhwc[:, :Ho, :, :Cout]
    return jnp.transpose(out_nhwc, (0, 3, 1, 2))    # back to NCHW


def _reference_forward(x_nchw, weight, bias, *, activation="linear", gain=1.0,
                       activation_clamp=None):
    """Pure-JAX reference (lax conv), using the same bf16-quantised operands as the kernel."""
    Cout, Cin, K, _ = weight.shape
    pad = K // 2
    wg = 1.0 / math.sqrt(Cin * K * K)
    w = (weight * wg).astype(jnp.bfloat16).astype(jnp.float32)
    xq = x_nchw.astype(jnp.bfloat16).astype(jnp.float32)
    out = jax.lax.conv_general_dilated(
        xq, w, window_strides=(1, 1), padding=[(pad, pad), (pad, pad)],
        dimension_numbers=("NCHW", "OIHW", "NCHW"))
    if bias is not None:
        out = out + bias.reshape(1, Cout, 1, 1)
    if activation == "lrelu":
        out = jnp.where(out >= 0, out, 0.2 * out)
    elif activation == "relu":
        out = jnp.maximum(out, 0.0)
    out = out * (_ACT_DEF_GAIN[activation] * gain)
    if activation_clamp is not None:
        c = activation_clamp * gain
        out = jnp.clip(out, -c, c)
    return out


if __name__ == "__main__":
    key = jax.random.PRNGKey(0)
    kx, kw, kb, kx2, kw2 = jax.random.split(key, 5)

    # ---- Test 1: module defaults (linear, zero bias), single row slab.
    N, Cin, Cout, K, H, W = 2, 4, 8, 3, 16, 16
    x = jax.random.normal(kx, (N, Cin, H, W), dtype=jnp.float32)
    weight = jax.random.normal(kw, (Cout, Cin, K, K), dtype=jnp.float32)   # torch.randn
    bias = jnp.zeros((Cout,), dtype=jnp.float32)                           # torch.zeros

    out = jax.block_until_ready(conv2d_forward(x, weight, bias))
    ref = _reference_forward(x, weight, bias)
    assert out.shape == (N, Cout, H, W)
    assert jnp.allclose(out, ref, atol=1e-3, rtol=1e-3), float(jnp.max(jnp.abs(out - ref)))

    # ---- Test 2: lrelu + gain + clamp, non-zero bias, ragged H row-slab tiling (tile_h=8, H=18).
    H2, W2 = 18, 16
    x2 = jax.random.normal(kx2, (N, Cin, H2, W2), dtype=jnp.float32)
    w2 = jax.random.normal(kw2, (Cout, Cin, K, K), dtype=jnp.float32)
    b2 = 0.1 * jax.random.normal(kb, (Cout,), dtype=jnp.float32)

    out2 = jax.block_until_ready(conv2d_forward(
        x2, w2, b2, activation="lrelu", gain=0.7, activation_clamp=0.5, tile_h=8))
    ref2 = _reference_forward(x2, w2, b2, activation="lrelu", gain=0.7, activation_clamp=0.5)
    assert out2.shape == (N, Cout, H2, W2)
    assert jnp.allclose(out2, ref2, atol=1e-3, rtol=1e-3), float(jnp.max(jnp.abs(out2 - ref2)))

    print("KERNEL_OK")
</pallas_src>

<mosaic_0001>
module attributes {stable_mosaic.version = 11 : i64} {
  func.func @_conv2d_bias_act_kernel(%arg0: i32, %arg1: i32, %arg2: i32, %arg3: memref<1x18x18x4xbf16, #tpu.memory_space<vmem>>, %arg4: memref<36x128xbf16, #tpu.memory_space<vmem>>, %arg5: memref<1x128xf32, #tpu.memory_space<vmem>>, %arg6: memref<1x16x16x128xf32, #tpu.memory_space<vmem>>) attributes {dimension_semantics = [#tpu.dimension_semantics<parallel>, #tpu.dimension_semantics<parallel>, #tpu.dimension_semantics<parallel>], iteration_bounds = array<i64: 2, 1, 1>, scalar_prefetch = 0 : i64, scratch_operands = 0 : i64, tpu.core_type = #tpu.core_type<tc>, window_params = [{transform_indices = @transform_0, window_bounds = array<i64: 1, 18, 18, 4>}, {transform_indices = @transform_1, window_bounds = array<i64: 36, 128>}, {transform_indices = @transform_2, window_bounds = array<i64: 1, 128>}, {transform_indices = @transform_3, window_bounds = array<i64: 1, 16, 16, 128>}]} {
    %c0 = arith.constant 0 : index
    %c0_0 = arith.constant 0 : index
    %c0_1 = arith.constant 0 : index
    %c0_2 = arith.constant 0 : index
    %0 = vector.load %arg3[%c0, %c0_0, %c0_1, %c0_2] : memref<1x18x18x4xbf16, #tpu.memory_space<vmem>>, vector<1x16x16x4xbf16>
    %1 = vector.shape_cast %0 : vector<1x16x16x4xbf16> to vector<16x16x4xbf16>
    %c0_3 = arith.constant 0 : index
    %c0_4 = arith.constant 0 : index
    %c1 = arith.constant 1 : index
    %c0_5 = arith.constant 0 : index
    %2 = vector.load %arg3[%c0_3, %c0_4, %c1, %c0_5] : memref<1x18x18x4xbf16, #tpu.memory_space<vmem>>, vector<1x16x16x4xbf16>
    %3 = vector.shape_cast %2 : vector<1x16x16x4xbf16> to vector<16x16x4xbf16>
    %c0_6 = arith.constant 0 : index
    %c0_7 = arith.constant 0 : index
    %c2 = arith.constant 2 : index
    %c0_8 = arith.constant 0 : index
    %4 = vector.load %arg3[%c0_6, %c0_7, %c2, %c0_8] : memref<1x18x18x4xbf16, #tpu.memory_space<vmem>>, vector<1x16x16x4xbf16>
    %5 = vector.shape_cast %4 : vector<1x16x16x4xbf16> to vector<16x16x4xbf16>
    %c0_9 = arith.constant 0 : index
    %c1_10 = arith.constant 1 : index
    %c0_11 = arith.constant 0 : index
    %c0_12 = arith.constant 0 : index
    %6 = vector.load %arg3[%c0_9, %c1_10, %c0_11, %c0_12] : memref<1x18x18x4xbf16, #tpu.memory_space<vmem>>, vector<1x16x16x4xbf16>
    %7 = vector.shape_cast %6 : vector<1x16x16x4xbf16> to vector<16x16x4xbf16>
    %c0_13 = arith.constant 0 : index
    %c1_14 = arith.constant 1 : index
    %c1_15 = arith.constant 1 : index
    %c0_16 = arith.constant 0 : index
    %8 = vector.load %arg3[%c0_13, %c1_14, %c1_15, %c0_16] : memref<1x18x18x4xbf16, #tpu.memory_space<vmem>>, vector<1x16x16x4xbf16>
    %9 = vector.shape_cast %8 : vector<1x16x16x4xbf16> to vector<16x16x4xbf16>
    %c0_17 = arith.constant 0 : index
    %c1_18 = arith.constant 1 : index
    %c2_19 = arith.constant 2 : index
    %c0_20 = arith.constant 0 : index
    %10 = vector.load %arg3[%c0_17, %c1_18, %c2_19, %c0_20] : memref<1x18x18x4xbf16, #tpu.memory_space<vmem>>, vector<1x16x16x4xbf16>
    %11 = vector.shape_cast %10 : vector<1x16x16x4xbf16> to vector<16x16x4xbf16>
    %c0_21 = arith.constant 0 : index
    %c2_22 = arith.constant 2 : index
    %c0_23 = arith.constant 0 : index
    %c0_24 = arith.constant 0 : index
    %12 = vector.load %arg3[%c0_21, %c2_22, %c0_23, %c0_24] : memref<1x18x18x4xbf16, #tpu.memory_space<vmem>>, vector<1x16x16x4xbf16>
    %13 = vector.shape_cast %12 : vector<1x16x16x4xbf16> to vector<16x16x4xbf16>
    %c0_25 = arith.constant 0 : index
    %c2_26 = arith.constant 2 : index
    %c1_27 = arith.constant 1 : index
    %c0_28 = arith.constant 0 : index
    %14 = vector.load %arg3[%c0_25, %c2_26, %c1_27, %c0_28] : memref<1x18x18x4xbf16, #tpu.memory_space<vmem>>, vector<1x16x16x4xbf16>
    %15 = vector.shape_cast %14 : vector<1x16x16x4xbf16> to vector<16x16x4xbf16>
    %c0_29 = arith.constant 0 : index
    %c2_30 = arith.constant 2 : index
    %c2_31 = arith.constant 2 : index
    %c0_32 = arith.constant 0 : index
    %16 = vector.load %arg3[%c0_29, %c2_30, %c2_31, %c0_32] : memref<1x18x18x4xbf16, #tpu.memory_space<vmem>>, vector<1x16x16x4xbf16>
    %17 = vector.shape_cast %16 : vector<1x16x16x4xbf16> to vector<16x16x4xbf16>
    %18 = tpu.concatenate %1, %3, %5, %7, %9, %11, %13, %15, %17 in 2 : vector<16x16x4xbf16>, vector<16x16x4xbf16>, vector<16x16x4xbf16>, vector<16x16x4xbf16>, vector<16x16x4xbf16>, vector<16x16x4xbf16>, vector<16x16x4xbf16>, vector<16x16x4xbf16>, vector<16x16x4xbf16> -> vector<16x16x36xbf16>
    %19 = vector.shape_cast %18 : vector<16x16x36xbf16> to vector<256x36xbf16>
    %c0_33 = arith.constant 0 : index
    %c0_34 = arith.constant 0 : index
    %20 = vector.load %arg4[%c0_33, %c0_34] : memref<36x128xbf16, #tpu.memory_space<vmem>>, vector<36x128xbf16>
    %cst = arith.constant dense<0.000000e+00> : vector<256x128xf32>
    %21 = tpu.matmul %19, %20, %cst {dimension_numbers = #tpu.dot_dimension_numbers<[1], [0], [0], [1], [0, 0, 1, 1], [], []>} : vector<256x36xbf16>, vector<36x128xbf16>, vector<256x128xf32> -> vector<256x128xf32>
    %c0_35 = arith.constant 0 : index
    %c0_36 = arith.constant 0 : index
    %22 = vector.load %arg5[%c0_35, %c0_36] : memref<1x128xf32, #tpu.memory_space<vmem>>, vector<1x128xf32>
    %23 = vector.broadcast %22 : vector<1x128xf32> to vector<256x128xf32>
    %24 = arith.addf %21, %23 : vector<256x128xf32>
    %25 = vector.shape_cast %24 : vector<256x128xf32> to vector<1x16x16x128xf32>
    %c0_37 = arith.constant 0 : index
    %c0_38 = arith.constant 0 : index
    %c0_39 = arith.constant 0 : index
    %c0_40 = arith.constant 0 : index
    %26 = vector.load %arg6[%c0_37, %c0_38, %c0_39, %c0_40] : memref<1x16x16x128xf32, #tpu.memory_space<vmem>>, vector<1x16x16x128xf32>
    tpu.vector_store %arg6[%c0_37, %c0_38, %c0_39, %c0_40], %25 {strides = array<i32>} : memref<1x16x16x128xf32, #tpu.memory_space<vmem>>, vector<1x16x16x128xf32>,
    return
  }
  func.func @transform_0(%arg0: i32, %arg1: i32, %arg2: i32) -> (i32, i32, i32, i32) {
    %c1_i32 = arith.constant 1 : i32
    %0 = arith.muli %arg0, %c1_i32 : i32
    %1 = arith.addi %0, %arg2 : i32
    %c0_i32 = arith.constant 0 : i32
    %c0_i32_0 = arith.constant 0 : i32
    %c0_i32_1 = arith.constant 0 : i32
    %c0_i32_2 = arith.constant 0 : i32
    return %1, %c0_i32, %c0_i32_0, %c0_i32_1 : i32, i32, i32, i32
  }
  func.func @transform_1(%arg0: i32, %arg1: i32, %arg2: i32) -> (i32, i32) {
    %c0_i32 = arith.constant 0 : i32
    %c0_i32_0 = arith.constant 0 : i32
    return %c0_i32, %arg1 : i32, i32
  }
  func.func @transform_2(%arg0: i32, %arg1: i32, %arg2: i32) -> (i32, i32) {
    %c0_i32 = arith.constant 0 : i32
    %c0_i32_0 = arith.constant 0 : i32
    return %c0_i32, %arg1 : i32, i32
  }
  func.func @transform_3(%arg0: i32, %arg1: i32, %arg2: i32) -> (i32, i32, i32, i32) {
    %c0_i32 = arith.constant 0 : i32
    %c0_i32_0 = arith.constant 0 : i32
    return %arg0, %arg2, %c0_i32, %arg1 : i32, i32, i32, i32
  }
}

</mosaic_0001>

<llo_original>
// kernel: tpu_custom_call.1
$region0: #{tpu_custom_call.1}
  #allocation0 [shape = 'u32[]', space=smem, size = 0x4, offset = 0x4, fixed_abs, tag = 'smem constant byte address 0x4 - core index']
  #allocation1 [shape = 'u32[144,128]{1,0:T(1,128)}', space=vmem, size = 0x12000, scoped, tag = 'internal scratch']
  %s0 = inlined_call_operand.vmem [shape: bf16[2,18,18,4], index: 0, kind: input, shape index: {}]
  %s1 = inlined_call_operand.vmem [shape: bf16[36,128], index: 1, kind: input, shape index: {}]
  %s2 = inlined_call_operand.vmem [shape: f32[1,128], index: 2, kind: input, shape index: {}]
  %s3 = inlined_call_operand.hbm [shape: f32[2,16,16,128], index: 3, kind: output, shape index: {}]
  %s4 = sld [smem:[#allocation0]]
  $region45: #{tpu_custom_call.1} parent=0
    _
  %s6 = ssub.s32 1, %s4
  %s7 = scalar_select 0, %s6, %s4
  $region1: #{tpu_custom_call.1} parent=0
    #allocation2 [shape = 'u8[262144]{0}', space=vmem, size = 0x40000, scoped, tag = 'output window, operand 0']
    #allocation3 [shape = 's32[2]{0}', space=sflag, size = 0x8, scoped, tag = 'scoped memory for tpu_custom_call.1']
    %8 = vsyncpa [#allocation3], 0
    %s9 = scalar_lea.sflag [#allocation3], 1
    %10 = vsyncpa %s9, 0
    loop: start=0, step=1, limit=4
    $region2: #{tpu_custom_call.1} parent=1 // loop_pre_header
      _
    $region3: #{tpu_custom_call.1} parent=1 // loop_header
      %s12 = sphi 0, %s16
      %p13 = scmp.ge.s32.totalorder %s12, 4
      %s19 = sphi 0, %s38
      %s20 = sphi 0, %s34
      %s21 = sphi 0, %s30
      %s22 = sphi 0, %s19
      %s23 = sphi 0, %s20
      %s24 = sphi 0, %s21
      %s25 = sphi 0, %s22
      %s26 = sphi 0, %s23
      %s27 = sphi 0, %s24
      %s43 = sphi 0, %s45
      %s46 = sphi 0, %s43
      %s47 = sphi 0, %s46
      %s63 = sphi 0, %s47
      %s69 = sphi 0, %s71
      %s72 = sphi 0, %s69
      %s73 = sphi 0, %s72
      %s89 = sphi 0, %s73
      %s95 = sphi 0, %s97
      %s98 = sphi 0, %s95
      %s99 = sphi 0, %s98
      %s115 = sphi 0, %s99
      %s125 = sphi 0, %s127
      %s128 = sphi 0, %s125
      %s129 = sphi 0, %s128
      %s145 = sphi 0, %s129
    $region4: #{tpu_custom_call.1} parent=1 // loop_header_branch
      %15 = sbr.rel (%p13) target = $region8
    $region5: #{tpu_custom_call.1} parent=1 // loop_body
      %s17 = ssub.s32 %s12, 1
      %s18 = ssub.s32 %s12, 2
      %s28 = sadd.s32 1, %s21
      %p29 = scmp.ge.s32.totalorder %s28, 1
      %s30 = scalar_select %p29, 0, %s28
      %s31 = sadd.s32 1, %s20
      %s32 = scalar_select %p29, %s31, %s20
      %p33 = scmp.ge.s32.totalorder %s32, 1
      %s34 = scalar_select %p33, 0, %s32
      %s35 = sadd.s32 1, %s19
      %s36 = scalar_select %p33, %s35, %s19
      %p37 = scmp.ge.s32.totalorder %s36, 2
      %s38 = scalar_select %p37, 0, %s36
      %s39 = sadd.s32 %s19, %s21
      %s40 = sadd.s32 %s38, %s30
      %s41 = ssub.s32 %s39, %s40
      %p42 = scmp.eq.s32.totalorder %s41, 0
      %s44 = sadd.s32 %s43, 1
      %s45 = scalar_select %p42, %s43, %s44
      %p48 = pneg %p42
      %p49 = scmp.eq.s32.totalorder %s12, 1
      %p50 = por %p48, %p49
      %p51 = scmp.ne.s32.totalorder %s43, %s46
      %p52 = scmp.eq.s32.totalorder %s12, 0
      %p53 = por %p51, %p52
      %p54 = scmp.ne.s32.totalorder %s43, %s46
      %p55 = scmp.eq.s32.totalorder %s17, 1
      %p56 = por %p54, %p55
      %p57 = scmp.ne.s32.totalorder %s46, %s47
      %p58 = scmp.eq.s32.totalorder %s17, 0
      %p59 = por %p57, %p58
      %p60 = scmp.ne.s32.totalorder %s46, %s47
      %p61 = scmp.eq.s32.totalorder %s18, 1
      %p62 = por %p60, %p61
      %p64 = scmp.ne.s32.totalorder %s47, %s63
      %p65 = scmp.eq.s32.totalorder %s18, 0
      %p66 = por %p64, %p65
      %s67 = ssub.s32 %s20, %s34
      %p68 = scmp.eq.s32.totalorder %s67, 0
      %s70 = sadd.s32 %s69, 1
      %s71 = scalar_select %p68, %s69, %s70
      %p74 = pneg %p68
      %p75 = scmp.eq.s32.totalorder %s12, 1
      %p76 = por %p74, %p75
      %p77 = scmp.ne.s32.totalorder %s69, %s72
      %p78 = scmp.eq.s32.totalorder %s12, 0
      %p79 = por %p77, %p78
      %p80 = scmp.ne.s32.totalorder %s69, %s72
      %p81 = scmp.eq.s32.totalorder %s17, 1
      %p82 = por %p80, %p81
      %p83 = scmp.ne.s32.totalorder %s72, %s73
      %p84 = scmp.eq.s32.totalorder %s17, 0
      %p85 = por %p83, %p84
      %p86 = scmp.ne.s32.totalorder %s72, %s73
      %p87 = scmp.eq.s32.totalorder %s18, 1
      %p88 = por %p86, %p87
      %p90 = scmp.ne.s32.totalorder %s73, %s89
      %p91 = scmp.eq.s32.totalorder %s18, 0
      %p92 = por %p90, %p91
      %s93 = ssub.s32 %s20, %s34
      %p94 = scmp.eq.s32.totalorder %s93, 0
      %s96 = sadd.s32 %s95, 1
      %s97 = scalar_select %p94, %s95, %s96
      %p100 = pneg %p94
      %p101 = scmp.eq.s32.totalorder %s12, 1
      %p102 = por %p100, %p101
      %p103 = scmp.ne.s32.totalorder %s95, %s98
      %p104 = scmp.eq.s32.totalorder %s12, 0
      %p105 = por %p103, %p104
      %p106 = scmp.ne.s32.totalorder %s95, %s98
      %p107 = scmp.eq.s32.totalorder %s17, 1
      %p108 = por %p106, %p107
      %p109 = scmp.ne.s32.totalorder %s98, %s99
      %p110 = scmp.eq.s32.totalorder %s17, 0
      %p111 = por %p109, %p110
      %p112 = scmp.ne.s32.totalorder %s98, %s99
      %p113 = scmp.eq.s32.totalorder %s18, 1
      %p114 = por %p112, %p113
      %p116 = scmp.ne.s32.totalorder %s99, %s115
      %p117 = scmp.eq.s32.totalorder %s18, 0
      %p118 = por %p116, %p117
      %s119 = ssub.s32 %s19, %s38
      %s120 = ssub.s32 %s21, %s30
      %s121 = sor.u32 %s119, %s120
      %s122 = ssub.s32 %s20, %s34
      %s123 = sor.u32 %s121, %s122
      %p124 = scmp.eq.s32.totalorder %s123, 0
      %s126 = sadd.s32 %s125, 1
      %s127 = scalar_select %p124, %s125, %s126
      %p130 = pneg %p124
      %p131 = scmp.eq.s32.totalorder %s12, 1
      %p132 = por %p130, %p131
      %p133 = scmp.ne.s32.totalorder %s125, %s128
      %p134 = scmp.eq.s32.totalorder %s12, 0
      %p135 = por %p133, %p134
      %p136 = scmp.ne.s32.totalorder %s125, %s128
      %p137 = scmp.eq.s32.totalorder %s17, 1
      %p138 = por %p136, %p137
      %p139 = scmp.ne.s32.totalorder %s128, %s129
      %p140 = scmp.eq.s32.totalorder %s17, 0
      %p141 = por %p139, %p140
      %p142 = scmp.ne.s32.totalorder %s128, %s129
      %p143 = scmp.eq.s32.totalorder %s18, 1
      %p144 = por %p142, %p143
      %p146 = scmp.ne.s32.totalorder %s129, %s145
      %p147 = scmp.eq.s32.totalorder %s18, 0
      %p148 = por %p146, %p147
      %p149 = scmp.le.s32.totalorder 1, %s12
      %p150 = scmp.lt.s32.totalorder %s12, 3
      %p151 = pnand %p149, %p150
      %p152 = pneg %p151
      // Predicated region
      $region9: #{tpu_custom_call.1} parent=5 // pred_check
        _
      $region10: #{tpu_custom_call.1} parent=5 // pred_check_branch
        %154 = sbr.rel (%p151) target = $region12
      $region11: #{tpu_custom_call.1} parent=5 // pred_region
        %s155 = ssub.s32 %s12, 1
        // Predicated region
        $region13: #{tpu_custom_call.1} parent=11 // pred_check
          %p156 = pneg %p85
        $region14: #{tpu_custom_call.1} parent=11 // pred_check_branch
          %158 = sbr.rel (%p156) target = $region16
        $region15: #{tpu_custom_call.1} parent=11 // pred_region
          %p159 = scmp.lt.s32.totalorder %s23, 0
          %s160 = scalar_select %p159, %s23, 0
          %s161 = smul.addr %s160, 4
          %s162 = scalar_lea.vmem %s1, %s161
        $region16: #{tpu_custom_call.1} parent=11 // pred_fallthru
          _
        // Predicated region
        $region17: #{tpu_custom_call.1} parent=11 // pred_check
          %p163 = pneg %p111
        $region18: #{tpu_custom_call.1} parent=11 // pred_check_branch
          %165 = sbr.rel (%p163) target = $region20
        $region19: #{tpu_custom_call.1} parent=11 // pred_region
          %p166 = scmp.lt.s32.totalorder %s23, 0
          %s167 = scalar_select %p166, %s23, 0
          %s168 = scalar_lea.vmem %s2, %s167
        $region20: #{tpu_custom_call.1} parent=11 // pred_fallthru
          _
      $region12: #{tpu_custom_call.1} parent=5 // pred_fallthru
        _
      %p169 = scmp.lt.s32.totalorder %s12, 2
      // Predicated region
      $region21: #{tpu_custom_call.1} parent=5 // pred_check
        %p170 = pneg %p169
      $region22: #{tpu_custom_call.1} parent=5 // pred_check_branch
        %172 = sbr.rel (%p170) target = $region24
      $region23: #{tpu_custom_call.1} parent=5 // pred_region
        // Predicated region
        $region25: #{tpu_custom_call.1} parent=23 // pred_check
          %p173 = pneg %p53
        $region26: #{tpu_custom_call.1} parent=23 // pred_check_branch
          %175 = sbr.rel (%p173) target = $region28
        $region27: #{tpu_custom_call.1} parent=23 // pred_region
          %s176 = sadd.s32 %s19, %s21
          %p177 = scmp.lt.s32.totalorder %s176, 1
          %s178 = scalar_select %p177, %s176, 1
          %s179 = smul.addr %s178, 54
          %s180 = smul.addr %s179, 4
          %s181 = scalar_lea.vmem %s0, %s180
          %s182 = sadd.s32 %s19, %s21
        $region28: #{tpu_custom_call.1} parent=23 // pred_fallthru
          _
      $region24: #{tpu_custom_call.1} parent=5 // pred_fallthru
        _
      %p183 = scmp.le.s32.totalorder 1, %s12
      %p184 = scmp.lt.s32.totalorder %s12, 3
      %p185 = pnand %p183, %p184
      %p186 = pneg %p185
      // Predicated region
      $region29: #{tpu_custom_call.1} parent=5 // pred_check
        _
      $region30: #{tpu_custom_call.1} parent=5 // pred_check_branch
        %188 = sbr.rel (%p185) target = $region32
      $region31: #{tpu_custom_call.1} parent=5 // pred_region
        %s189 = ssub.s32 %s12, 1
        %s190 = sadd.s32 %s22, %s24
        %p191 = scmp.lt.s32.totalorder %s190, 1
        %s192 = scalar_select %p191, %s190, 1
        %s193 = smul.addr %s192, 54
        %s194 = smul.addr %s193, 4
        %s195 = scalar_lea.vmem %s0, %s194
        %p196 = pneg %p59
        %p197 = pneg %p56
        %p198 = scmp.lt.s32.totalorder %s23, 0
        %s199 = scalar_select %p198, %s23, 0
        %s200 = smul.addr %s199, 4
        %s201 = scalar_lea.vmem %s1, %s200
        %p202 = pneg %p85
        %p203 = pneg %p82
        %p204 = scmp.lt.s32.totalorder %s23, 0
        %s205 = scalar_select %p204, %s23, 0
        %s206 = scalar_lea.vmem %s2, %s205
        %p207 = pneg %p111
        %p208 = pneg %p108
        %p209 = pneg %p141
        %p210 = pneg %p138
        %s211 = sand.u32 %s128, 1
        %s212 = scalar_lea.sflag [#allocation3], %s211
        %s213 = sand.u32 %s128, 1
        %s214 = smul.addr %s213, 256
        %s215 = scalar_lea.vmem [#allocation2], %s214
        %s216 = sadd.s32 %s22, %s24
        %p217 = scmp.lt.s32.totalorder %s216, 1
        %s218 = scalar_select %p217, %s216, 1
        %s219 = smul.addr %s218, 54
        %s220 = smul.addr %s219, 4
        %s221 = scalar_lea.vmem %s0, %s220
        %s222 = sadd.s32 %s22, %s24
        %p223 = scmp.lt.s32.totalorder %s23, 0
        %s224 = scalar_select %p223, %s23, 0
        %s225 = smul.addr %s224, 4
        %s226 = scalar_lea.vmem %s1, %s225
        %p227 = scmp.lt.s32.totalorder %s23, 0
        %s228 = scalar_select %p227, %s23, 0
        %s229 = scalar_lea.vmem %s2, %s228
        %s230 = smul.u32 16, %s24
        %v232 = vld [vmem:[%s221] sm:$0xf]
        %v233 = vld [vmem:[%s221 + $0x4] sm:$0xf]
        %v234 = vld [vmem:[%s221 + $0xc] sm:$0xf]
        %v235 = vld [vmem:[%s221 + $0x10] sm:$0xf]
        %v236 = vld [vmem:[%s221 + $0x18] sm:$0xf]
        %v237 = vld [vmem:[%s221 + $0x1c] sm:$0xf]
        %v238 = vld [vmem:[%s221 + $0x24] sm:$0xf]
        %v239 = vld [vmem:[%s221 + $0x28] sm:$0xf]
        %v240 = vld [vmem:[%s221 + $0x30] sm:$0xf]
        %v241 = vld [vmem:[%s221 + $0x34] sm:$0xf]
        %v242 = vld [vmem:[%s221 + $0x3c] sm:$0xf]
        %v243 = vld [vmem:[%s221 + $0x40] sm:$0xf]
        %v244 = vld [vmem:[%s221 + $0x48] sm:$0xf]
        %v245 = vld [vmem:[%s221 + $0x4c] sm:$0xf]
        %v246 = vld [vmem:[%s221 + $0x54] sm:$0xf]
        %v247 = vld [vmem:[%s221 + $0x58] sm:$0xf]
        %v248 = vld [vmem:[%s221 + $0x60] sm:$0xf]
        %v249 = vld [vmem:[%s221 + $0x64] sm:$0xf]
        %v250 = vld [vmem:[%s221 + $0x6c] sm:$0xf]
        %v251 = vld [vmem:[%s221 + $0x70] sm:$0xf]
        %v252 = vld [vmem:[%s221 + $0x78] sm:$0xf]
        %v253 = vld [vmem:[%s221 + $0x7c] sm:$0xf]
        %v254 = vld [vmem:[%s221 + $0x84] sm:$0xf]
        %v255 = vld [vmem:[%s221 + $0x88] sm:$0xf]
        %v256 = vld [vmem:[%s221 + $0x90] sm:$0xf]
        %v257 = vld [vmem:[%s221 + $0x94] sm:$0xf]
        %v258 = vld [vmem:[%s221 + $0x9c] sm:$0xf]
        %v259 = vld [vmem:[%s221 + $0xa0] sm:$0xf]
        %v260 = vld [vmem:[%s221 + $0xa8] sm:$0xf]
        %v261 = vld [vmem:[%s221 + $0xac] sm:$0xf]
        %v262 = vld [vmem:[%s221 + $0xb4] sm:$0xf]
        %v263 = vld [vmem:[%s221 + $0xb8] sm:$0xf]
        %v264 = vld [vmem:[%s221 + $0x8] sm:$0x1]
        %v265 = vld [vmem:[%s221 + $0x14] sm:$0x1]
        %v266 = vld [vmem:[%s221 + $0x20] sm:$0x1]
        %v267 = vld [vmem:[%s221 + $0x2c] sm:$0x1]
        %v268 = vld [vmem:[%s221 + $0x38] sm:$0x1]
        %v269 = vld [vmem:[%s221 + $0x44] sm:$0x1]
        %v270 = vld [vmem:[%s221 + $0x50] sm:$0x1]
        %v271 = vld [vmem:[%s221 + $0x5c] sm:$0x1]
        %v272 = vld [vmem:[%s221 + $0x68] sm:$0x1]
        %v273 = vld [vmem:[%s221 + $0x74] sm:$0x1]
        %v274 = vld [vmem:[%s221 + $0x80] sm:$0x1]
        %v275 = vld [vmem:[%s221 + $0x8c] sm:$0x1]
        %v276 = vld [vmem:[%s221 + $0x98] sm:$0x1]
        %v277 = vld [vmem:[%s221 + $0xa4] sm:$0x1]
        %v278 = vld [vmem:[%s221 + $0xb0] sm:$0x1]
        %v279 = vld [vmem:[%s221 + $0xbc] sm:$0x1]
        %v280 = vld [vmem:[%s221] sm:$0xe]
        %v281 = vld [vmem:[%s221 + $0xc] sm:$0xe]
        %v282 = vld [vmem:[%s221 + $0x18] sm:$0xe]
        %v283 = vld [vmem:[%s221 + $0x24] sm:$0xe]
        %v284 = vld [vmem:[%s221 + $0x30] sm:$0xe]
        %v285 = vld [vmem:[%s221 + $0x3c] sm:$0xe]
        %v286 = vld [vmem:[%s221 + $0x48] sm:$0xe]
        %v287 = vld [vmem:[%s221 + $0x54] sm:$0xe]
        %v288 = vld [vmem:[%s221 + $0x60] sm:$0xe]
        %v289 = vld [vmem:[%s221 + $0x6c] sm:$0xe]
        %v290 = vld [vmem:[%s221 + $0x78] sm:$0xe]
        %v291 = vld [vmem:[%s221 + $0x84] sm:$0xe]
        %v292 = vld [vmem:[%s221 + $0x90] sm:$0xe]
        %v293 = vld [vmem:[%s221 + $0x9c] sm:$0xe]
        %v294 = vld [vmem:[%s221 + $0xa8] sm:$0xe]
        %v295 = vld [vmem:[%s221 + $0xb4] sm:$0xe]
        %s296 = scalar_lea.vmem %s221, 12
        %v297 = vld [vmem:[%s296] sm:$0xf]
        %v298 = vld [vmem:[%s296 + $0x4] sm:$0xf]
        %v299 = vld [vmem:[%s296 + $0xc] sm:$0xf]
        %v300 = vld [vmem:[%s296 + $0x10] sm:$0xf]
        %v301 = vld [vmem:[%s296 + $0x18] sm:$0xf]
        %v302 = vld [vmem:[%s296 + $0x1c] sm:$0xf]
        %v303 = vld [vmem:[%s296 + $0x24] sm:$0xf]
        %v304 = vld [vmem:[%s296 + $0x28] sm:$0xf]
        %v305 = vld [vmem:[%s296 + $0x30] sm:$0xf]
        %v306 = vld [vmem:[%s296 + $0x34] sm:$0xf]
        %v307 = vld [vmem:[%s296 + $0x3c] sm:$0xf]
        %v308 = vld [vmem:[%s296 + $0x40] sm:$0xf]
        %v309 = vld [vmem:[%s296 + $0x48] sm:$0xf]
        %v310 = vld [vmem:[%s296 + $0x4c] sm:$0xf]
        %v311 = vld [vmem:[%s296 + $0x54] sm:$0xf]
        %v312 = vld [vmem:[%s296 + $0x58] sm:$0xf]
        %v313 = vld [vmem:[%s296 + $0x60] sm:$0xf]
        %v314 = vld [vmem:[%s296 + $0x64] sm:$0xf]
        %v315 = vld [vmem:[%s296 + $0x6c] sm:$0xf]
        %v316 = vld [vmem:[%s296 + $0x70] sm:$0xf]
        %v317 = vld [vmem:[%s296 + $0x78] sm:$0xf]
        %v318 = vld [vmem:[%s296 + $0x7c] sm:$0xf]
        %v319 = vld [vmem:[%s296 + $0x84] sm:$0xf]
        %v320 = vld [vmem:[%s296 + $0x88] sm:$0xf]
        %v321 = vld [vmem:[%s296 + $0x90] sm:$0xf]
        %v322 = vld [vmem:[%s296 + $0x94] sm:$0xf]
        %v323 = vld [vmem:[%s296 + $0x9c] sm:$0xf]
        %v324 = vld [vmem:[%s296 + $0xa0] sm:$0xf]
        %v325 = vld [vmem:[%s296 + $0xa8] sm:$0xf]
        %v326 = vld [vmem:[%s296 + $0xac] sm:$0xf]
        %v327 = vld [vmem:[%s296 + $0xb4] sm:$0xf]
        %v328 = vld [vmem:[%s296 + $0xb8] sm:$0xf]
        %v329 = vld [vmem:[%s296 + $0x8] sm:$0x1]
        %v330 = vld [vmem:[%s296 + $0x14] sm:$0x1]
        %v331 = vld [vmem:[%s296 + $0x20] sm:$0x1]
        %v332 = vld [vmem:[%s296 + $0x2c] sm:$0x1]
        %v333 = vld [vmem:[%s296 + $0x38] sm:$0x1]
        %v334 = vld [vmem:[%s296 + $0x44] sm:$0x1]
        %v335 = vld [vmem:[%s296 + $0x50] sm:$0x1]
        %v336 = vld [vmem:[%s296 + $0x5c] sm:$0x1]
        %v337 = vld [vmem:[%s296 + $0x68] sm:$0x1]
        %v338 = vld [vmem:[%s296 + $0x74] sm:$0x1]
        %v339 = vld [vmem:[%s296 + $0x80] sm:$0x1]
        %v340 = vld [vmem:[%s296 + $0x8c] sm:$0x1]
        %v341 = vld [vmem:[%s296 + $0x98] sm:$0x1]
        %v342 = vld [vmem:[%s296 + $0xa4] sm:$0x1]
        %v343 = vld [vmem:[%s296 + $0xb0] sm:$0x1]
        %v344 = vld [vmem:[%s296 + $0xbc] sm:$0x1]
        %v345 = vld [vmem:[%s296] sm:$0xe]
        %v346 = vld [vmem:[%s296 + $0xc] sm:$0xe]
        %v347 = vld [vmem:[%s296 + $0x18] sm:$0xe]
        %v348 = vld [vmem:[%s296 + $0x24] sm:$0xe]
        %v349 = vld [vmem:[%s296 + $0x30] sm:$0xe]
        %v350 = vld [vmem:[%s296 + $0x3c] sm:$0xe]
        %v351 = vld [vmem:[%s296 + $0x48] sm:$0xe]
        %v352 = vld [vmem:[%s296 + $0x54] sm:$0xe]
        %v353 = vld [vmem:[%s296 + $0x60] sm:$0xe]
        %v354 = vld [vmem:[%s296 + $0x6c] sm:$0xe]
        %v355 = vld [vmem:[%s296 + $0x78] sm:$0xe]
        %v356 = vld [vmem:[%s296 + $0x84] sm:$0xe]
        %v357 = vld [vmem:[%s296 + $0x90] sm:$0xe]
        %v358 = vld [vmem:[%s296 + $0x9c] sm:$0xe]
        %v359 = vld [vmem:[%s296 + $0xa8] sm:$0xe]
        %v360 = vld [vmem:[%s296 + $0xb4] sm:$0xe]
        %s361 = scalar_lea.vmem %s221, 24
        %v362 = vld [vmem:[%s361] sm:$0xf]
        %v363 = vld [vmem:[%s361 + $0x4] sm:$0xf]
        %v364 = vld [vmem:[%s361 + $0xc] sm:$0xf]
        %v365 = vld [vmem:[%s361 + $0x10] sm:$0xf]
        %v366 = vld [vmem:[%s361 + $0x18] sm:$0xf]
        %v367 = vld [vmem:[%s361 + $0x1c] sm:$0xf]
        %v368 = vld [vmem:[%s361 + $0x24] sm:$0xf]
        %v369 = vld [vmem:[%s361 + $0x28] sm:$0xf]
        %v370 = vld [vmem:[%s361 + $0x30] sm:$0xf]
        %v371 = vld [vmem:[%s361 + $0x34] sm:$0xf]
        %v372 = vld [vmem:[%s361 + $0x3c] sm:$0xf]
        %v373 = vld [vmem:[%s361 + $0x40] sm:$0xf]
        %v374 = vld [vmem:[%s361 + $0x48] sm:$0xf]
        %v375 = vld [vmem:[%s361 + $0x4c] sm:$0xf]
        %v376 = vld [vmem:[%s361 + $0x54] sm:$0xf]
        %v377 = vld [vmem:[%s361 + $0x58] sm:$0xf]
        %v378 = vld [vmem:[%s361 + $0x60] sm:$0xf]
        %v379 = vld [vmem:[%s361 + $0x64] sm:$0xf]
        %v380 = vld [vmem:[%s361 + $0x6c] sm:$0xf]
        %v381 = vld [vmem:[%s361 + $0x70] sm:$0xf]
        %v382 = vld [vmem:[%s361 + $0x78] sm:$0xf]
        %v383 = vld [vmem:[%s361 + $0x7c] sm:$0xf]
        %v384 = vld [vmem:[%s361 + $0x84] sm:$0xf]
        %v385 = vld [vmem:[%s361 + $0x88] sm:$0xf]
        %v386 = vld [vmem:[%s361 + $0x90] sm:$0xf]
        %v387 = vld [vmem:[%s361 + $0x94] sm:$0xf]
        %v388 = vld [vmem:[%s361 + $0x9c] sm:$0xf]
        %v389 = vld [vmem:[%s361 + $0xa0] sm:$0xf]
        %v390 = vld [vmem:[%s361 + $0xa8] sm:$0xf]
        %v391 = vld [vmem:[%s361 + $0xac] sm:$0xf]
        %v392 = vld [vmem:[%s361 + $0xb4] sm:$0xf]
        %v393 = vld [vmem:[%s361 + $0xb8] sm:$0xf]
        %v394 = vld [vmem:[%s361 + $0x8] sm:$0x1]
        %v395 = vld [vmem:[%s361 + $0x14] sm:$0x1]
        %v396 = vld [vmem:[%s361 + $0x20] sm:$0x1]
        %v397 = vld [vmem:[%s361 + $0x2c] sm:$0x1]
        %v398 = vld [vmem:[%s361 + $0x38] sm:$0x1]
        %v399 = vld [vmem:[%s361 + $0x44] sm:$0x1]
        %v400 = vld [vmem:[%s361 + $0x50] sm:$0x1]
        %v401 = vld [vmem:[%s361 + $0x5c] sm:$0x1]
        %v402 = vld [vmem:[%s361 + $0x68] sm:$0x1]
        %v403 = vld [vmem:[%s361 + $0x74] sm:$0x1]
        %v404 = vld [vmem:[%s361 + $0x80] sm:$0x1]
        %v405 = vld [vmem:[%s361 + $0x8c] sm:$0x1]
        %v406 = vld [vmem:[%s361 + $0x98] sm:$0x1]
        %v407 = vld [vmem:[%s361 + $0xa4] sm:$0x1]
        %v408 = vld [vmem:[%s361 + $0xb0] sm:$0x1]
        %v409 = vld [vmem:[%s361 + $0xbc] sm:$0x1]
        %v410 = vld [vmem:[%s361] sm:$0xe]
        %v411 = vld [vmem:[%s361 + $0xc] sm:$0xe]
        %v412 = vld [vmem:[%s361 + $0x18] sm:$0xe]
        %v413 = vld [vmem:[%s361 + $0x24] sm:$0xe]
        %v414 = vld [vmem:[%s361 + $0x30] sm:$0xe]
        %v415 = vld [vmem:[%s361 + $0x3c] sm:$0xe]
        %v416 = vld [vmem:[%s361 + $0x48] sm:$0xe]
        %v417 = vld [vmem:[%s361 + $0x54] sm:$0xe]
        %v418 = vld [vmem:[%s361 + $0x60] sm:$0xe]
        %v419 = vld [vmem:[%s361 + $0x6c] sm:$0xe]
        %v420 = vld [vmem:[%s361 + $0x78] sm:$0xe]
        %v421 = vld [vmem:[%s361 + $0x84] sm:$0xe]
        %v422 = vld [vmem:[%s361 + $0x90] sm:$0xe]
        %v423 = vld [vmem:[%s361 + $0x9c] sm:$0xe]
        %v424 = vld [vmem:[%s361 + $0xa8] sm:$0xe]
        %v425 = vld [vmem:[%s361 + $0xb4] sm:$0xe]
        %v458 = vunpack.c.l.b16 %v232
        %v459 = vunpack.c.l.b16 %v233
        %v460 = vunpack.c.l.b16 %v234
        %v461 = vunpack.c.l.b16 %v235
        %v462 = vunpack.c.l.b16 %v236
        %v463 = vunpack.c.l.b16 %v237
        %v464 = vunpack.c.l.b16 %v238
        %v465 = vunpack.c.l.b16 %v239
        %v466 = vunpack.c.l.b16 %v240
        %v467 = vunpack.c.l.b16 %v241
        %v468 = vunpack.c.l.b16 %v242
        %v469 = vunpack.c.l.b16 %v243
        %v470 = vunpack.c.l.b16 %v244
        %v471 = vunpack.c.l.b16 %v245
        %v472 = vunpack.c.l.b16 %v246
        %v473 = vunpack.c.l.b16 %v247
        %v474 = vunpack.c.l.b16 %v248
        %v475 = vunpack.c.l.b16 %v249
        %v476 = vunpack.c.l.b16 %v250
        %v477 = vunpack.c.l.b16 %v251
        %v478 = vunpack.c.l.b16 %v252
        %v479 = vunpack.c.l.b16 %v253
        %v480 = vunpack.c.l.b16 %v254
        %v481 = vunpack.c.l.b16 %v255
        %v482 = vunpack.c.l.b16 %v256
        %v483 = vunpack.c.l.b16 %v257
        %v484 = vunpack.c.l.b16 %v258
        %v485 = vunpack.c.l.b16 %v259
        %v486 = vunpack.c.l.b16 %v260
        %v487 = vunpack.c.l.b16 %v261
        %v488 = vunpack.c.l.b16 %v262
        %v489 = vunpack.c.l.b16 %v263
        %v490 = vpack.c.b16 %v459, %v458
        %v491 = vpack.c.b16 %v461, %v460
        %v492 = vpack.c.b16 %v463, %v462
        %v493 = vpack.c.b16 %v465, %v464
        %v494 = vpack.c.b16 %v467, %v466
        %v495 = vpack.c.b16 %v469, %v468
        %v496 = vpack.c.b16 %v471, %v470
        %v497 = vpack.c.b16 %v473, %v472
        %v498 = vpack.c.b16 %v475, %v474
        %v499 = vpack.c.b16 %v477, %v476
        %v500 = vpack.c.b16 %v479, %v478
        %v501 = vpack.c.b16 %v481, %v480
        %v502 = vpack.c.b16 %v483, %v482
        %v503 = vpack.c.b16 %v485, %v484
        %v504 = vpack.c.b16 %v487, %v486
        %v505 = vpack.c.b16 %v489, %v488
        %v522 = vunpack.c.l.b16 %v264
        %v523 = vunpack.c.l.b16 %v265
        %v524 = vunpack.c.l.b16 %v266
        %v525 = vunpack.c.l.b16 %v267
        %v526 = vunpack.c.l.b16 %v268
        %v527 = vunpack.c.l.b16 %v269
        %v528 = vunpack.c.l.b16 %v270
        %v529 = vunpack.c.l.b16 %v271
        %v530 = vunpack.c.l.b16 %v272
        %v531 = vunpack.c.l.b16 %v273
        %v532 = vunpack.c.l.b16 %v274
        %v533 = vunpack.c.l.b16 %v275
        %v534 = vunpack.c.l.b16 %v276
        %v535 = vunpack.c.l.b16 %v277
        %v536 = vunpack.c.l.b16 %v278
        %v537 = vunpack.c.l.b16 %v279
        %v538 = vpack.c.b16 %v522, %v522
        %v539 = vpack.c.b16 %v523, %v523
        %v540 = vpack.c.b16 %v524, %v524
        %v541 = vpack.c.b16 %v525, %v525
        %v542 = vpack.c.b16 %v526, %v526
        %v543 = vpack.c.b16 %v527, %v527
        %v544 = vpack.c.b16 %v528, %v528
        %v545 = vpack.c.b16 %v529, %v529
        %v546 = vpack.c.b16 %v530, %v530
        %v547 = vpack.c.b16 %v531, %v531
        %v548 = vpack.c.b16 %v532, %v532
        %v549 = vpack.c.b16 %v533, %v533
        %v550 = vpack.c.b16 %v534, %v534
        %v551 = vpack.c.b16 %v535, %v535
        %v552 = vpack.c.b16 %v536, %v536
        %v553 = vpack.c.b16 %v537, %v537
        %vm554 = vsmask.f32 7424
        %v556 = vshrl.u32 %v490, 16
        %v558 = vshll.u32 %v490, 16
        %v560 = vrot.slane %v558, 1
        %v561 = vor.u32 %v556, %v560
        %v563 = vshll.u32 %v538, 16
        %v565 = vrot.slane %v563, 1
        %v566 = vsel %vm554, %v561, %v565
        %v568 = vshrl.u32 %v491, 16
        %v570 = vshll.u32 %v491, 16
        %v572 = vrot.slane %v570, 1
        %v573 = vor.u32 %v568, %v572
        %v575 = vshll.u32 %v539, 16
        %v577 = vrot.slane %v575, 1
        %v578 = vsel %vm554, %v573, %v577
        %v580 = vshrl.u32 %v492, 16
        %v582 = vshll.u32 %v492, 16
        %v584 = vrot.slane %v582, 1
        %v585 = vor.u32 %v580, %v584
        %v587 = vshll.u32 %v540, 16
        %v589 = vrot.slane %v587, 1
        %v590 = vsel %vm554, %v585, %v589
        %v592 = vshrl.u32 %v493, 16
        %v594 = vshll.u32 %v493, 16
        %v596 = vrot.slane %v594, 1
        %v597 = vor.u32 %v592, %v596
        %v599 = vshll.u32 %v541, 16
        %v601 = vrot.slane %v599, 1
        %v602 = vsel %vm554, %v597, %v601
        %v604 = vshrl.u32 %v494, 16
        %v606 = vshll.u32 %v494, 16
        %v608 = vrot.slane %v606, 1
        %v609 = vor.u32 %v604, %v608
        %v611 = vshll.u32 %v542, 16
        %v613 = vrot.slane %v611, 1
        %v614 = vsel %vm554, %v609, %v613
        %v616 = vshrl.u32 %v495, 16
        %v618 = vshll.u32 %v495, 16
        %v620 = vrot.slane %v618, 1
        %v621 = vor.u32 %v616, %v620
        %v623 = vshll.u32 %v543, 16
        %v625 = vrot.slane %v623, 1
        %v626 = vsel %vm554, %v621, %v625
        %v628 = vshrl.u32 %v496, 16
        %v630 = vshll.u32 %v496, 16
        %v632 = vrot.slane %v630, 1
        %v633 = vor.u32 %v628, %v632
        %v635 = vshll.u32 %v544, 16
        %v637 = vrot.slane %v635, 1
        %v638 = vsel %vm554, %v633, %v637
        %v640 = vshrl.u32 %v497, 16
        %v642 = vshll.u32 %v497, 16
        %v644 = vrot.slane %v642, 1
        %v645 = vor.u32 %v640, %v644
        %v647 = vshll.u32 %v545, 16
        %v649 = vrot.slane %v647, 1
        %v650 = vsel %vm554, %v645, %v649
        %v652 = vshrl.u32 %v498, 16
        %v654 = vshll.u32 %v498, 16
        %v656 = vrot.slane %v654, 1
        %v657 = vor.u32 %v652, %v656
        %v659 = vshll.u32 %v546, 16
        %v661 = vrot.slane %v659, 1
        %v662 = vsel %vm554, %v657, %v661
        %v664 = vshrl.u32 %v499, 16
        %v666 = vshll.u32 %v499, 16
        %v668 = vrot.slane %v666, 1
        %v669 = vor.u32 %v664, %v668
        %v671 = vshll.u32 %v547, 16
        %v673 = vrot.slane %v671, 1
        %v674 = vsel %vm554, %v669, %v673
        %v676 = vshrl.u32 %v500, 16
        %v678 = vshll.u32 %v500, 16
        %v680 = vrot.slane %v678, 1
        %v681 = vor.u32 %v676, %v680
        %v683 = vshll.u32 %v548, 16
        %v685 = vrot.slane %v683, 1
        %v686 = vsel %vm554, %v681, %v685
        %v688 = vshrl.u32 %v501, 16
        %v690 = vshll.u32 %v501, 16
        %v692 = vrot.slane %v690, 1
        %v693 = vor.u32 %v688, %v692
        %v695 = vshll.u32 %v549, 16
        %v697 = vrot.slane %v695, 1
        %v698 = vsel %vm554, %v693, %v697
        %v700 = vshrl.u32 %v502, 16
        %v702 = vshll.u32 %v502, 16
        %v704 = vrot.slane %v702, 1
        %v705 = vor.u32 %v700, %v704
        %v707 = vshll.u32 %v550, 16
        %v709 = vrot.slane %v707, 1
        %v710 = vsel %vm554, %v705, %v709
        %v712 = vshrl.u32 %v503, 16
        %v714 = vshll.u32 %v503, 16
        %v716 = vrot.slane %v714, 1
        %v717 = vor.u32 %v712, %v716
        %v719 = vshll.u32 %v551, 16
        %v721 = vrot.slane %v719, 1
        %v722 = vsel %vm554, %v717, %v721
        %v724 = vshrl.u32 %v504, 16
        %v726 = vshll.u32 %v504, 16
        %v728 = vrot.slane %v726, 1
        %v729 = vor.u32 %v724, %v728
        %v731 = vshll.u32 %v552, 16
        %v733 = vrot.slane %v731, 1
        %v734 = vsel %vm554, %v729, %v733
        %v736 = vshrl.u32 %v505, 16
        %v738 = vshll.u32 %v505, 16
        %v740 = vrot.slane %v738, 1
        %v741 = vor.u32 %v736, %v740
        %v743 = vshll.u32 %v553, 16
        %v745 = vrot.slane %v743, 1
        %v746 = vsel %vm554, %v741, %v745
        %747 = vrot.lane.b32.xlu0 %v566, 4
        %v748 = vpop.permute.xlu0 %747
        %749 = vrot.lane.b32.xlu0 %v578, 4
        %v750 = vpop.permute.xlu0 %749
        %751 = vrot.lane.b32.xlu0 %v590, 4
        %v752 = vpop.permute.xlu0 %751
        %753 = vrot.lane.b32.xlu0 %v602, 4
        %v754 = vpop.permute.xlu0 %753
        %755 = vrot.lane.b32.xlu0 %v614, 4
        %v756 = vpop.permute.xlu0 %755
        %757 = vrot.lane.b32.xlu0 %v626, 4
        %v758 = vpop.permute.xlu0 %757
        %759 = vrot.lane.b32.xlu0 %v638, 4
        %v760 = vpop.permute.xlu0 %759
        %761 = vrot.lane.b32.xlu0 %v650, 4
        %v762 = vpop.permute.xlu0 %761
        %763 = vrot.lane.b32.xlu0 %v662, 4
        %v764 = vpop.permute.xlu0 %763
        %765 = vrot.lane.b32.xlu0 %v674, 4
        %v766 = vpop.permute.xlu0 %765
        %767 = vrot.lane.b32.xlu0 %v686, 4
        %v768 = vpop.permute.xlu0 %767
        %769 = vrot.lane.b32.xlu0 %v698, 4
        %v770 = vpop.permute.xlu0 %769
        %771 = vrot.lane.b32.xlu0 %v710, 4
        %v772 = vpop.permute.xlu0 %771
        %773 = vrot.lane.b32.xlu0 %v722, 4
        %v774 = vpop.permute.xlu0 %773
        %775 = vrot.lane.b32.xlu0 %v734, 4
        %v776 = vpop.permute.xlu0 %775
        %777 = vrot.lane.b32.xlu0 %v746, 4
        %v778 = vpop.permute.xlu0 %777
        %v795 = vunpack.c.l.b16 %v280
        %v796 = vunpack.c.l.b16 %v281
        %v797 = vunpack.c.l.b16 %v282
        %v798 = vunpack.c.l.b16 %v283
        %v799 = vunpack.c.l.b16 %v284
        %v800 = vunpack.c.l.b16 %v285
        %v801 = vunpack.c.l.b16 %v286
        %v802 = vunpack.c.l.b16 %v287
        %v803 = vunpack.c.l.b16 %v288
        %v804 = vunpack.c.l.b16 %v289
        %v805 = vunpack.c.l.b16 %v290
        %v806 = vunpack.c.l.b16 %v291
        %v807 = vunpack.c.l.b16 %v292
        %v808 = vunpack.c.l.b16 %v293
        %v809 = vunpack.c.l.b16 %v294
        %v810 = vunpack.c.l.b16 %v295
        %v811 = vpack.c.b16 %v459, %v795
        %v812 = vpack.c.b16 %v461, %v796
        %v813 = vpack.c.b16 %v463, %v797
        %v814 = vpack.c.b16 %v465, %v798
        %v815 = vpack.c.b16 %v467, %v799
        %v816 = vpack.c.b16 %v469, %v800
        %v817 = vpack.c.b16 %v471, %v801
        %v818 = vpack.c.b16 %v473, %v802
        %v819 = vpack.c.b16 %v475, %v803
        %v820 = vpack.c.b16 %v477, %v804
        %v821 = vpack.c.b16 %v479, %v805
        %v822 = vpack.c.b16 %v481, %v806
        %v823 = vpack.c.b16 %v483, %v807
        %v824 = vpack.c.b16 %v485, %v808
        %v825 = vpack.c.b16 %v487, %v809
        %v826 = vpack.c.b16 %v489, %v810
        %vm827 = vcmask 1046528
        %v828 = vrot.slane %v811, 1
        %v829 = vrot.slane %v538, 1
        %v830 = vsel %vm827, %v828, %v829
        %v831 = vrot.slane %v812, 1
        %v832 = vrot.slane %v539, 1
        %v833 = vsel %vm827, %v831, %v832
        %v834 = vrot.slane %v813, 1
        %v835 = vrot.slane %v540, 1
        %v836 = vsel %vm827, %v834, %v835
        %v837 = vrot.slane %v814, 1
        %v838 = vrot.slane %v541, 1
        %v839 = vsel %vm827, %v837, %v838
        %v840 = vrot.slane %v815, 1
        %v841 = vrot.slane %v542, 1
        %v842 = vsel %vm827, %v840, %v841
        %v843 = vrot.slane %v816, 1
        %v844 = vrot.slane %v543, 1
        %v845 = vsel %vm827, %v843, %v844
        %v846 = vrot.slane %v817, 1
        %v847 = vrot.slane %v544, 1
        %v848 = vsel %vm827, %v846, %v847
        %v849 = vrot.slane %v818, 1
        %v850 = vrot.slane %v545, 1
        %v851 = vsel %vm827, %v849, %v850
        %v852 = vrot.slane %v819, 1
        %v853 = vrot.slane %v546, 1
        %v854 = vsel %vm827, %v852, %v853
        %v855 = vrot.slane %v820, 1
        %v856 = vrot.slane %v547, 1
        %v857 = vsel %vm827, %v855, %v856
        %v858 = vrot.slane %v821, 1
        %v859 = vrot.slane %v548, 1
        %v860 = vsel %vm827, %v858, %v859
        %v861 = vrot.slane %v822, 1
        %v862 = vrot.slane %v549, 1
        %v863 = vsel %vm827, %v861, %v862
        %v864 = vrot.slane %v823, 1
        %v865 = vrot.slane %v550, 1
        %v866 = vsel %vm827, %v864, %v865
        %v867 = vrot.slane %v824, 1
        %v868 = vrot.slane %v551, 1
        %v869 = vsel %vm827, %v867, %v868
        %v870 = vrot.slane %v825, 1
        %v871 = vrot.slane %v552, 1
        %v872 = vsel %vm827, %v870, %v871
        %v873 = vrot.slane %v826, 1
        %v874 = vrot.slane %v553, 1
        %v875 = vsel %vm827, %v873, %v874
        %876 = vrot.lane.b32.xlu0 %v830, 8
        %v877 = vpop.permute.xlu0 %876
        %878 = vrot.lane.b32.xlu0 %v833, 8
        %v879 = vpop.permute.xlu0 %878
        %880 = vrot.lane.b32.xlu0 %v836, 8
        %v881 = vpop.permute.xlu0 %880
        %882 = vrot.lane.b32.xlu0 %v839, 8
        %v883 = vpop.permute.xlu0 %882
        %884 = vrot.lane.b32.xlu0 %v842, 8
        %v885 = vpop.permute.xlu0 %884
        %886 = vrot.lane.b32.xlu0 %v845, 8
        %v887 = vpop.permute.xlu0 %886
        %888 = vrot.lane.b32.xlu0 %v848, 8
        %v889 = vpop.permute.xlu0 %888
        %890 = vrot.lane.b32.xlu0 %v851, 8
        %v891 = vpop.permute.xlu0 %890
        %892 = vrot.lane.b32.xlu0 %v854, 8
        %v893 = vpop.permute.xlu0 %892
        %894 = vrot.lane.b32.xlu0 %v857, 8
        %v895 = vpop.permute.xlu0 %894
        %896 = vrot.lane.b32.xlu0 %v860, 8
        %v897 = vpop.permute.xlu0 %896
        %898 = vrot.lane.b32.xlu0 %v863, 8
        %v899 = vpop.permute.xlu0 %898
        %900 = vrot.lane.b32.xlu0 %v866, 8
        %v901 = vpop.permute.xlu0 %900
        %902 = vrot.lane.b32.xlu0 %v869, 8
        %v903 = vpop.permute.xlu0 %902
        %904 = vrot.lane.b32.xlu0 %v872, 8
        %v905 = vpop.permute.xlu0 %904
        %906 = vrot.lane.b32.xlu0 %v875, 8
        %v907 = vpop.permute.xlu0 %906
        %v940 = vunpack.c.l.b16 %v297
        %v941 = vunpack.c.l.b16 %v298
        %v942 = vunpack.c.l.b16 %v299
        %v943 = vunpack.c.l.b16 %v300
        %v944 = vunpack.c.l.b16 %v301
        %v945 = vunpack.c.l.b16 %v302
        %v946 = vunpack.c.l.b16 %v303
        %v947 = vunpack.c.l.b16 %v304
        %v948 = vunpack.c.l.b16 %v305
        %v949 = vunpack.c.l.b16 %v306
        %v950 = vunpack.c.l.b16 %v307
        %v951 = vunpack.c.l.b16 %v308
        %v952 = vunpack.c.l.b16 %v309
        %v953 = vunpack.c.l.b16 %v310
        %v954 = vunpack.c.l.b16 %v311
        %v955 = vunpack.c.l.b16 %v312
        %v956 = vunpack.c.l.b16 %v313
        %v957 = vunpack.c.l.b16 %v314
        %v958 = vunpack.c.l.b16 %v315
        %v959 = vunpack.c.l.b16 %v316
        %v960 = vunpack.c.l.b16 %v317
        %v961 = vunpack.c.l.b16 %v318
        %v962 = vunpack.c.l.b16 %v319
        %v963 = vunpack.c.l.b16 %v320
        %v964 = vunpack.c.l.b16 %v321
        %v965 = vunpack.c.l.b16 %v322
        %v966 = vunpack.c.l.b16 %v323
        %v967 = vunpack.c.l.b16 %v324
        %v968 = vunpack.c.l.b16 %v325
        %v969 = vunpack.c.l.b16 %v326
        %v970 = vunpack.c.l.b16 %v327
        %v971 = vunpack.c.l.b16 %v328
        %v972 = vpack.c.b16 %v941, %v940
        %v973 = vpack.c.b16 %v943, %v942
        %v974 = vpack.c.b16 %v945, %v944
        %v975 = vpack.c.b16 %v947, %v946
        %v976 = vpack.c.b16 %v949, %v948
        %v977 = vpack.c.b16 %v951, %v950
        %v978 = vpack.c.b16 %v953, %v952
        %v979 = vpack.c.b16 %v955, %v954
        %v980 = vpack.c.b16 %v957, %v956
        %v981 = vpack.c.b16 %v959, %v958
        %v982 = vpack.c.b16 %v961, %v960
        %v983 = vpack.c.b16 %v963, %v962
        %v984 = vpack.c.b16 %v965, %v964
        %v985 = vpack.c.b16 %v967, %v966
        %v986 = vpack.c.b16 %v969, %v968
        %v987 = vpack.c.b16 %v971, %v970
        %988 = vrot.lane.b32.xlu0 %v972, 12
        %v989 = vpop.permute.xlu0 %988
        %990 = vrot.lane.b32.xlu0 %v973, 12
        %v991 = vpop.permute.xlu0 %990
        %992 = vrot.lane.b32.xlu0 %v974, 12
        %v993 = vpop.permute.xlu0 %992
        %994 = vrot.lane.b32.xlu0 %v975, 12
        %v995 = vpop.permute.xlu0 %994
        %996 = vrot.lane.b32.xlu0 %v976, 12
        %v997 = vpop.permute.xlu0 %996
        %998 = vrot.lane.b32.xlu0 %v977, 12
        %v999 = vpop.permute.xlu0 %998
        %1000 = vrot.lane.b32.xlu0 %v978, 12
        %v1001 = vpop.permute.xlu0 %1000
        %1002 = vrot.lane.b32.xlu0 %v979, 12
        %v1003 = vpop.permute.xlu0 %1002
        %1004 = vrot.lane.b32.xlu0 %v980, 12
        %v1005 = vpop.permute.xlu0 %1004
        %1006 = vrot.lane.b32.xlu0 %v981, 12
        %v1007 = vpop.permute.xlu0 %1006
        %1008 = vrot.lane.b32.xlu0 %v982, 12
        %v1009 = vpop.permute.xlu0 %1008
        %1010 = vrot.lane.b32.xlu0 %v983, 12
        %v1011 = vpop.permute.xlu0 %1010
        %1012 = vrot.lane.b32.xlu0 %v984, 12
        %v1013 = vpop.permute.xlu0 %1012
        %1014 = vrot.lane.b32.xlu0 %v985, 12
        %v1015 = vpop.permute.xlu0 %1014
        %1016 = vrot.lane.b32.xlu0 %v986, 12
        %v1017 = vpop.permute.xlu0 %1016
        %1018 = vrot.lane.b32.xlu0 %v987, 12
        %v1019 = vpop.permute.xlu0 %1018
        %v1036 = vunpack.c.l.b16 %v329
        %v1037 = vunpack.c.l.b16 %v330
        %v1038 = vunpack.c.l.b16 %v331
        %v1039 = vunpack.c.l.b16 %v332
        %v1040 = vunpack.c.l.b16 %v333
        %v1041 = vunpack.c.l.b16 %v334
        %v1042 = vunpack.c.l.b16 %v335
        %v1043 = vunpack.c.l.b16 %v336
        %v1044 = vunpack.c.l.b16 %v337
        %v1045 = vunpack.c.l.b16 %v338
        %v1046 = vunpack.c.l.b16 %v339
        %v1047 = vunpack.c.l.b16 %v340
        %v1048 = vunpack.c.l.b16 %v341
        %v1049 = vunpack.c.l.b16 %v342
        %v1050 = vunpack.c.l.b16 %v343
        %v1051 = vunpack.c.l.b16 %v344
        %v1052 = vpack.c.b16 %v1036, %v1036
        %v1053 = vpack.c.b16 %v1037, %v1037
        %v1054 = vpack.c.b16 %v1038, %v1038
        %v1055 = vpack.c.b16 %v1039, %v1039
        %v1056 = vpack.c.b16 %v1040, %v1040
        %v1057 = vpack.c.b16 %v1041, %v1041
        %v1058 = vpack.c.b16 %v1042, %v1042
        %v1059 = vpack.c.b16 %v1043, %v1043
        %v1060 = vpack.c.b16 %v1044, %v1044
        %v1061 = vpack.c.b16 %v1045, %v1045
        %v1062 = vpack.c.b16 %v1046, %v1046
        %v1063 = vpack.c.b16 %v1047, %v1047
        %v1064 = vpack.c.b16 %v1048, %v1048
        %v1065 = vpack.c.b16 %v1049, %v1049
        %v1066 = vpack.c.b16 %v1050, %v1050
        %v1067 = vpack.c.b16 %v1051, %v1051
        %v1069 = vshrl.u32 %v972, 16
        %v1071 = vshll.u32 %v972, 16
        %v1073 = vrot.slane %v1071, 1
        %v1074 = vor.u32 %v1069, %v1073
        %v1076 = vshll.u32 %v1052, 16
        %v1078 = vrot.slane %v1076, 1
        %v1079 = vsel %vm554, %v1074, %v1078
        %v1081 = vshrl.u32 %v973, 16
        %v1083 = vshll.u32 %v973, 16
        %v1085 = vrot.slane %v1083, 1
        %v1086 = vor.u32 %v1081, %v1085
        %v1088 = vshll.u32 %v1053, 16
        %v1090 = vrot.slane %v1088, 1
        %v1091 = vsel %vm554, %v1086, %v1090
        %v1093 = vshrl.u32 %v974, 16
        %v1095 = vshll.u32 %v974, 16
        %v1097 = vrot.slane %v1095, 1
        %v1098 = vor.u32 %v1093, %v1097
        %v1100 = vshll.u32 %v1054, 16
        %v1102 = vrot.slane %v1100, 1
        %v1103 = vsel %vm554, %v1098, %v1102
        %v1105 = vshrl.u32 %v975, 16
        %v1107 = vshll.u32 %v975, 16
        %v1109 = vrot.slane %v1107, 1
        %v1110 = vor.u32 %v1105, %v1109
        %v1112 = vshll.u32 %v1055, 16
        %v1114 = vrot.slane %v1112, 1
        %v1115 = vsel %vm554, %v1110, %v1114
        %v1117 = vshrl.u32 %v976, 16
        %v1119 = vshll.u32 %v976, 16
        %v1121 = vrot.slane %v1119, 1
        %v1122 = vor.u32 %v1117, %v1121
        %v1124 = vshll.u32 %v1056, 16
        %v1126 = vrot.slane %v1124, 1
        %v1127 = vsel %vm554, %v1122, %v1126
        %v1129 = vshrl.u32 %v977, 16
        %v1131 = vshll.u32 %v977, 16
        %v1133 = vrot.slane %v1131, 1
        %v1134 = vor.u32 %v1129, %v1133
        %v1136 = vshll.u32 %v1057, 16
        %v1138 = vrot.slane %v1136, 1
        %v1139 = vsel %vm554, %v1134, %v1138
        %v1141 = vshrl.u32 %v978, 16
        %v1143 = vshll.u32 %v978, 16
        %v1145 = vrot.slane %v1143, 1
        %v1146 = vor.u32 %v1141, %v1145
        %v1148 = vshll.u32 %v1058, 16
        %v1150 = vrot.slane %v1148, 1
        %v1151 = vsel %vm554, %v1146, %v1150
        %v1153 = vshrl.u32 %v979, 16
        %v1155 = vshll.u32 %v979, 16
        %v1157 = vrot.slane %v1155, 1
        %v1158 = vor.u32 %v1153, %v1157
        %v1160 = vshll.u32 %v1059, 16
        %v1162 = vrot.slane %v1160, 1
        %v1163 = vsel %vm554, %v1158, %v1162
        %v1165 = vshrl.u32 %v980, 16
        %v1167 = vshll.u32 %v980, 16
        %v1169 = vrot.slane %v1167, 1
        %v1170 = vor.u32 %v1165, %v1169
        %v1172 = vshll.u32 %v1060, 16
        %v1174 = vrot.slane %v1172, 1
        %v1175 = vsel %vm554, %v1170, %v1174
        %v1177 = vshrl.u32 %v981, 16
        %v1179 = vshll.u32 %v981, 16
        %v1181 = vrot.slane %v1179, 1
        %v1182 = vor.u32 %v1177, %v1181
        %v1184 = vshll.u32 %v1061, 16
        %v1186 = vrot.slane %v1184, 1
        %v1187 = vsel %vm554, %v1182, %v1186
        %v1189 = vshrl.u32 %v982, 16
        %v1191 = vshll.u32 %v982, 16
        %v1193 = vrot.slane %v1191, 1
        %v1194 = vor.u32 %v1189, %v1193
        %v1196 = vshll.u32 %v1062, 16
        %v1198 = vrot.slane %v1196, 1
        %v1199 = vsel %vm554, %v1194, %v1198
        %v1201 = vshrl.u32 %v983, 16
        %v1203 = vshll.u32 %v983, 16
        %v1205 = vrot.slane %v1203, 1
        %v1206 = vor.u32 %v1201, %v1205
        %v1208 = vshll.u32 %v1063, 16
        %v1210 = vrot.slane %v1208, 1
        %v1211 = vsel %vm554, %v1206, %v1210
        %v1213 = vshrl.u32 %v984, 16
        %v1215 = vshll.u32 %v984, 16
        %v1217 = vrot.slane %v1215, 1
        %v1218 = vor.u32 %v1213, %v1217
        %v1220 = vshll.u32 %v1064, 16
        %v1222 = vrot.slane %v1220, 1
        %v1223 = vsel %vm554, %v1218, %v1222
        %v1225 = vshrl.u32 %v985, 16
        %v1227 = vshll.u32 %v985, 16
        %v1229 = vrot.slane %v1227, 1
        %v1230 = vor.u32 %v1225, %v1229
        %v1232 = vshll.u32 %v1065, 16
        %v1234 = vrot.slane %v1232, 1
        %v1235 = vsel %vm554, %v1230, %v1234
        %v1237 = vshrl.u32 %v986, 16
        %v1239 = vshll.u32 %v986, 16
        %v1241 = vrot.slane %v1239, 1
        %v1242 = vor.u32 %v1237, %v1241
        %v1244 = vshll.u32 %v1066, 16
        %v1246 = vrot.slane %v1244, 1
        %v1247 = vsel %vm554, %v1242, %v1246
        %v1249 = vshrl.u32 %v987, 16
        %v1251 = vshll.u32 %v987, 16
        %v1253 = vrot.slane %v1251, 1
        %v1254 = vor.u32 %v1249, %v1253
        %v1256 = vshll.u32 %v1067, 16
        %v1258 = vrot.slane %v1256, 1
        %v1259 = vsel %vm554, %v1254, %v1258
        %1260 = vrot.lane.b32.xlu0 %v1079, 16
        %v1261 = vpop.permute.xlu0 %1260
        %1262 = vrot.lane.b32.xlu0 %v1091, 16
        %v1263 = vpop.permute.xlu0 %1262
        %1264 = vrot.lane.b32.xlu0 %v1103, 16
        %v1265 = vpop.permute.xlu0 %1264
        %1266 = vrot.lane.b32.xlu0 %v1115, 16
        %v1267 = vpop.permute.xlu0 %1266
        %1268 = vrot.lane.b32.xlu0 %v1127, 16
        %v1269 = vpop.permute.xlu0 %1268
        %1270 = vrot.lane.b32.xlu0 %v1139, 16
        %v1271 = vpop.permute.xlu0 %1270
        %1272 = vrot.lane.b32.xlu0 %v1151, 16
        %v1273 = vpop.permute.xlu0 %1272
        %1274 = vrot.lane.b32.xlu0 %v1163, 16
        %v1275 = vpop.permute.xlu0 %1274
        %1276 = vrot.lane.b32.xlu0 %v1175, 16
        %v1277 = vpop.permute.xlu0 %1276
        %1278 = vrot.lane.b32.xlu0 %v1187, 16
        %v1279 = vpop.permute.xlu0 %1278
        %1280 = vrot.lane.b32.xlu0 %v1199, 16
        %v1281 = vpop.permute.xlu0 %1280
        %1282 = vrot.lane.b32.xlu0 %v1211, 16
        %v1283 = vpop.permute.xlu0 %1282
        %1284 = vrot.lane.b32.xlu0 %v1223, 16
        %v1285 = vpop.permute.xlu0 %1284
        %1286 = vrot.lane.b32.xlu0 %v1235, 16
        %v1287 = vpop.permute.xlu0 %1286
        %1288 = vrot.lane.b32.xlu0 %v1247, 16
        %v1289 = vpop.permute.xlu0 %1288
        %1290 = vrot.lane.b32.xlu0 %v1259, 16
        %v1291 = vpop.permute.xlu0 %1290
        %v1308 = vunpack.c.l.b16 %v345
        %v1309 = vunpack.c.l.b16 %v346
        %v1310 = vunpack.c.l.b16 %v347
        %v1311 = vunpack.c.l.b16 %v348
        %v1312 = vunpack.c.l.b16 %v349
        %v1313 = vunpack.c.l.b16 %v350
        %v1314 = vunpack.c.l.b16 %v351
        %v1315 = vunpack.c.l.b16 %v352
        %v1316 = vunpack.c.l.b16 %v353
        %v1317 = vunpack.c.l.b16 %v354
        %v1318 = vunpack.c.l.b16 %v355
        %v1319 = vunpack.c.l.b16 %v356
        %v1320 = vunpack.c.l.b16 %v357
        %v1321 = vunpack.c.l.b16 %v358
        %v1322 = vunpack.c.l.b16 %v359
        %v1323 = vunpack.c.l.b16 %v360
        %v1324 = vpack.c.b16 %v941, %v1308
        %v1325 = vpack.c.b16 %v943, %v1309
        %v1326 = vpack.c.b16 %v945, %v1310
        %v1327 = vpack.c.b16 %v947, %v1311
        %v1328 = vpack.c.b16 %v949, %v1312
        %v1329 = vpack.c.b16 %v951, %v1313
        %v1330 = vpack.c.b16 %v953, %v1314
        %v1331 = vpack.c.b16 %v955, %v1315
        %v1332 = vpack.c.b16 %v957, %v1316
        %v1333 = vpack.c.b16 %v959, %v1317
        %v1334 = vpack.c.b16 %v961, %v1318
        %v1335 = vpack.c.b16 %v963, %v1319
        %v1336 = vpack.c.b16 %v965, %v1320
        %v1337 = vpack.c.b16 %v967, %v1321
        %v1338 = vpack.c.b16 %v969, %v1322
        %v1339 = vpack.c.b16 %v971, %v1323
        %v1340 = vrot.slane %v1324, 1
        %v1341 = vrot.slane %v1052, 1
        %v1342 = vsel %vm827, %v1340, %v1341
        %v1343 = vrot.slane %v1325, 1
        %v1344 = vrot.slane %v1053, 1
        %v1345 = vsel %vm827, %v1343, %v1344
        %v1346 = vrot.slane %v1326, 1
        %v1347 = vrot.slane %v1054, 1
        %v1348 = vsel %vm827, %v1346, %v1347
        %v1349 = vrot.slane %v1327, 1
        %v1350 = vrot.slane %v1055, 1
        %v1351 = vsel %vm827, %v1349, %v1350
        %v1352 = vrot.slane %v1328, 1
        %v1353 = vrot.slane %v1056, 1
        %v1354 = vsel %vm827, %v1352, %v1353
        %v1355 = vrot.slane %v1329, 1
        %v1356 = vrot.slane %v1057, 1
        %v1357 = vsel %vm827, %v1355, %v1356
        %v1358 = vrot.slane %v1330, 1
        %v1359 = vrot.slane %v1058, 1
        %v1360 = vsel %vm827, %v1358, %v1359
        %v1361 = vrot.slane %v1331, 1
        %v1362 = vrot.slane %v1059, 1
        %v1363 = vsel %vm827, %v1361, %v1362
        %v1364 = vrot.slane %v1332, 1
        %v1365 = vrot.slane %v1060, 1
        %v1366 = vsel %vm827, %v1364, %v1365
        %v1367 = vrot.slane %v1333, 1
        %v1368 = vrot.slane %v1061, 1
        %v1369 = vsel %vm827, %v1367, %v1368
        %v1370 = vrot.slane %v1334, 1
        %v1371 = vrot.slane %v1062, 1
        %v1372 = vsel %vm827, %v1370, %v1371
        %v1373 = vrot.slane %v1335, 1
        %v1374 = vrot.slane %v1063, 1
        %v1375 = vsel %vm827, %v1373, %v1374
        %v1376 = vrot.slane %v1336, 1
        %v1377 = vrot.slane %v1064, 1
        %v1378 = vsel %vm827, %v1376, %v1377
        %v1379 = vrot.slane %v1337, 1
        %v1380 = vrot.slane %v1065, 1
        %v1381 = vsel %vm827, %v1379, %v1380
        %v1382 = vrot.slane %v1338, 1
        %v1383 = vrot.slane %v1066, 1
        %v1384 = vsel %vm827, %v1382, %v1383
        %v1385 = vrot.slane %v1339, 1
        %v1386 = vrot.slane %v1067, 1
        %v1387 = vsel %vm827, %v1385, %v1386
        %1388 = vrot.lane.b32.xlu0 %v1342, 20
        %v1389 = vpop.permute.xlu0 %1388
        %1390 = vrot.lane.b32.xlu0 %v1345, 20
        %v1391 = vpop.permute.xlu0 %1390
        %1392 = vrot.lane.b32.xlu0 %v1348, 20
        %v1393 = vpop.permute.xlu0 %1392
        %1394 = vrot.lane.b32.xlu0 %v1351, 20
        %v1395 = vpop.permute.xlu0 %1394
        %1396 = vrot.lane.b32.xlu0 %v1354, 20
        %v1397 = vpop.permute.xlu0 %1396
        %1398 = vrot.lane.b32.xlu0 %v1357, 20
        %v1399 = vpop.permute.xlu0 %1398
        %1400 = vrot.lane.b32.xlu0 %v1360, 20
        %v1401 = vpop.permute.xlu0 %1400
        %1402 = vrot.lane.b32.xlu0 %v1363, 20
        %v1403 = vpop.permute.xlu0 %1402
        %1404 = vrot.lane.b32.xlu0 %v1366, 20
        %v1405 = vpop.permute.xlu0 %1404
        %1406 = vrot.lane.b32.xlu0 %v1369, 20
        %v1407 = vpop.permute.xlu0 %1406
        %1408 = vrot.lane.b32.xlu0 %v1372, 20
        %v1409 = vpop.permute.xlu0 %1408
        %1410 = vrot.lane.b32.xlu0 %v1375, 20
        %v1411 = vpop.permute.xlu0 %1410
        %1412 = vrot.lane.b32.xlu0 %v1378, 20
        %v1413 = vpop.permute.xlu0 %1412
        %1414 = vrot.lane.b32.xlu0 %v1381, 20
        %v1415 = vpop.permute.xlu0 %1414
        %1416 = vrot.lane.b32.xlu0 %v1384, 20
        %v1417 = vpop.permute.xlu0 %1416
        %1418 = vrot.lane.b32.xlu0 %v1387, 20
        %v1419 = vpop.permute.xlu0 %1418
        %v1452 = vunpack.c.l.b16 %v362
        %v1453 = vunpack.c.l.b16 %v363
        %v1454 = vunpack.c.l.b16 %v364
        %v1455 = vunpack.c.l.b16 %v365
        %v1456 = vunpack.c.l.b16 %v366
        %v1457 = vunpack.c.l.b16 %v367
        %v1458 = vunpack.c.l.b16 %v368
        %v1459 = vunpack.c.l.b16 %v369
        %v1460 = vunpack.c.l.b16 %v370
        %v1461 = vunpack.c.l.b16 %v371
        %v1462 = vunpack.c.l.b16 %v372
        %v1463 = vunpack.c.l.b16 %v373
        %v1464 = vunpack.c.l.b16 %v374
        %v1465 = vunpack.c.l.b16 %v375
        %v1466 = vunpack.c.l.b16 %v376
        %v1467 = vunpack.c.l.b16 %v377
        %v1468 = vunpack.c.l.b16 %v378
        %v1469 = vunpack.c.l.b16 %v379
        %v1470 = vunpack.c.l.b16 %v380
        %v1471 = vunpack.c.l.b16 %v381
        %v1472 = vunpack.c.l.b16 %v382
        %v1473 = vunpack.c.l.b16 %v383
        %v1474 = vunpack.c.l.b16 %v384
        %v1475 = vunpack.c.l.b16 %v385
        %v1476 = vunpack.c.l.b16 %v386
        %v1477 = vunpack.c.l.b16 %v387
        %v1478 = vunpack.c.l.b16 %v388
        %v1479 = vunpack.c.l.b16 %v389
        %v1480 = vunpack.c.l.b16 %v390
        %v1481 = vunpack.c.l.b16 %v391
        %v1482 = vunpack.c.l.b16 %v392
        %v1483 = vunpack.c.l.b16 %v393
        %v1484 = vpack.c.b16 %v1453, %v1452
        %v1485 = vpack.c.b16 %v1455, %v1454
        %v1486 = vpack.c.b16 %v1457, %v1456
        %v1487 = vpack.c.b16 %v1459, %v1458
        %v1488 = vpack.c.b16 %v1461, %v1460
        %v1489 = vpack.c.b16 %v1463, %v1462
        %v1490 = vpack.c.b16 %v1465, %v1464
        %v1491 = vpack.c.b16 %v1467, %v1466
        %v1492 = vpack.c.b16 %v1469, %v1468
        %v1493 = vpack.c.b16 %v1471, %v1470
        %v1494 = vpack.c.b16 %v1473, %v1472
        %v1495 = vpack.c.b16 %v1475, %v1474
        %v1496 = vpack.c.b16 %v1477, %v1476
        %v1497 = vpack.c.b16 %v1479, %v1478
        %v1498 = vpack.c.b16 %v1481, %v1480
        %v1499 = vpack.c.b16 %v1483, %v1482
        %1500 = vrot.lane.b32.xlu0 %v1484, 24
        %v1501 = vpop.permute.xlu0 %1500
        %1502 = vrot.lane.b32.xlu0 %v1485, 24
        %v1503 = vpop.permute.xlu0 %1502
        %1504 = vrot.lane.b32.xlu0 %v1486, 24
        %v1505 = vpop.permute.xlu0 %1504
        %1506 = vrot.lane.b32.xlu0 %v1487, 24
        %v1507 = vpop.permute.xlu0 %1506
        %1508 = vrot.lane.b32.xlu0 %v1488, 24
        %v1509 = vpop.permute.xlu0 %1508
        %1510 = vrot.lane.b32.xlu0 %v1489, 24
        %v1511 = vpop.permute.xlu0 %1510
        %1512 = vrot.lane.b32.xlu0 %v1490, 24
        %v1513 = vpop.permute.xlu0 %1512
        %1514 = vrot.lane.b32.xlu0 %v1491, 24
        %v1515 = vpop.permute.xlu0 %1514
        %1516 = vrot.lane.b32.xlu0 %v1492, 24
        %v1517 = vpop.permute.xlu0 %1516
        %1518 = vrot.lane.b32.xlu0 %v1493, 24
        %v1519 = vpop.permute.xlu0 %1518
        %1520 = vrot.lane.b32.xlu0 %v1494, 24
        %v1521 = vpop.permute.xlu0 %1520
        %1522 = vrot.lane.b32.xlu0 %v1495, 24
        %v1523 = vpop.permute.xlu0 %1522
        %1524 = vrot.lane.b32.xlu0 %v1496, 24
        %v1525 = vpop.permute.xlu0 %1524
        %1526 = vrot.lane.b32.xlu0 %v1497, 24
        %v1527 = vpop.permute.xlu0 %1526
        %1528 = vrot.lane.b32.xlu0 %v1498, 24
        %v1529 = vpop.permute.xlu0 %1528
        %1530 = vrot.lane.b32.xlu0 %v1499, 24
        %v1531 = vpop.permute.xlu0 %1530
        %v1548 = vunpack.c.l.b16 %v394
        %v1549 = vunpack.c.l.b16 %v395
        %v1550 = vunpack.c.l.b16 %v396
        %v1551 = vunpack.c.l.b16 %v397
        %v1552 = vunpack.c.l.b16 %v398
        %v1553 = vunpack.c.l.b16 %v399
        %v1554 = vunpack.c.l.b16 %v400
        %v1555 = vunpack.c.l.b16 %v401
        %v1556 = vunpack.c.l.b16 %v402
        %v1557 = vunpack.c.l.b16 %v403
        %v1558 = vunpack.c.l.b16 %v404
        %v1559 = vunpack.c.l.b16 %v405
        %v1560 = vunpack.c.l.b16 %v406
        %v1561 = vunpack.c.l.b16 %v407
        %v1562 = vunpack.c.l.b16 %v408
        %v1563 = vunpack.c.l.b16 %v409
        %v1564 = vpack.c.b16 %v1548, %v1548
        %v1565 = vpack.c.b16 %v1549, %v1549
        %v1566 = vpack.c.b16 %v1550, %v1550
        %v1567 = vpack.c.b16 %v1551, %v1551
        %v1568 = vpack.c.b16 %v1552, %v1552
        %v1569 = vpack.c.b16 %v1553, %v1553
        %v1570 = vpack.c.b16 %v1554, %v1554
        %v1571 = vpack.c.b16 %v1555, %v1555
        %v1572 = vpack.c.b16 %v1556, %v1556
        %v1573 = vpack.c.b16 %v1557, %v1557
        %v1574 = vpack.c.b16 %v1558, %v1558
        %v1575 = vpack.c.b16 %v1559, %v1559
        %v1576 = vpack.c.b16 %v1560, %v1560
        %v1577 = vpack.c.b16 %v1561, %v1561
        %v1578 = vpack.c.b16 %v1562, %v1562
        %v1579 = vpack.c.b16 %v1563, %v1563
        %v1581 = vshrl.u32 %v1484, 16
        %v1583 = vshll.u32 %v1484, 16
        %v1585 = vrot.slane %v1583, 1
        %v1586 = vor.u32 %v1581, %v1585
        %v1588 = vshll.u32 %v1564, 16
        %v1590 = vrot.slane %v1588, 1
        %v1591 = vsel %vm554, %v1586, %v1590
        %v1593 = vshrl.u32 %v1485, 16
        %v1595 = vshll.u32 %v1485, 16
        %v1597 = vrot.slane %v1595, 1
        %v1598 = vor.u32 %v1593, %v1597
        %v1600 = vshll.u32 %v1565, 16
        %v1602 = vrot.slane %v1600, 1
        %v1603 = vsel %vm554, %v1598, %v1602
        %v1605 = vshrl.u32 %v1486, 16
        %v1607 = vshll.u32 %v1486, 16
        %v1609 = vrot.slane %v1607, 1
        %v1610 = vor.u32 %v1605, %v1609
        %v1612 = vshll.u32 %v1566, 16
        %v1614 = vrot.slane %v1612, 1
        %v1615 = vsel %vm554, %v1610, %v1614
        %v1617 = vshrl.u32 %v1487, 16
        %v1619 = vshll.u32 %v1487, 16
        %v1621 = vrot.slane %v1619, 1
        %v1622 = vor.u32 %v1617, %v1621
        %v1624 = vshll.u32 %v1567, 16
        %v1626 = vrot.slane %v1624, 1
        %v1627 = vsel %vm554, %v1622, %v1626
        %v1629 = vshrl.u32 %v1488, 16
        %v1631 = vshll.u32 %v1488, 16
        %v1633 = vrot.slane %v1631, 1
        %v1634 = vor.u32 %v1629, %v1633
        %v1636 = vshll.u32 %v1568, 16
        %v1638 = vrot.slane %v1636, 1
        %v1639 = vsel %vm554, %v1634, %v1638
        %v1641 = vshrl.u32 %v1489, 16
        %v1643 = vshll.u32 %v1489, 16
        %v1645 = vrot.slane %v1643, 1
        %v1646 = vor.u32 %v1641, %v1645
        %v1648 = vshll.u32 %v1569, 16
        %v1650 = vrot.slane %v1648, 1
        %v1651 = vsel %vm554, %v1646, %v1650
        %v1653 = vshrl.u32 %v1490, 16
        %v1655 = vshll.u32 %v1490, 16
        %v1657 = vrot.slane %v1655, 1
        %v1658 = vor.u32 %v1653, %v1657
        %v1660 = vshll.u32 %v1570, 16
        %v1662 = vrot.slane %v1660, 1
        %v1663 = vsel %vm554, %v1658, %v1662
        %v1665 = vshrl.u32 %v1491, 16
        %v1667 = vshll.u32 %v1491, 16
        %v1669 = vrot.slane %v1667, 1
        %v1670 = vor.u32 %v1665, %v1669
        %v1672 = vshll.u32 %v1571, 16
        %v1674 = vrot.slane %v1672, 1
        %v1675 = vsel %vm554, %v1670, %v1674
        %v1677 = vshrl.u32 %v1492, 16
        %v1679 = vshll.u32 %v1492, 16
        %v1681 = vrot.slane %v1679, 1
        %v1682 = vor.u32 %v1677, %v1681
        %v1684 = vshll.u32 %v1572, 16
        %v1686 = vrot.slane %v1684, 1
        %v1687 = vsel %vm554, %v1682, %v1686
        %v1689 = vshrl.u32 %v1493, 16
        %v1691 = vshll.u32 %v1493, 16
        %v1693 = vrot.slane %v1691, 1
        %v1694 = vor.u32 %v1689, %v1693
        %v1696 = vshll.u32 %v1573, 16
        %v1698 = vrot.slane %v1696, 1
        %v1699 = vsel %vm554, %v1694, %v1698
        %v1701 = vshrl.u32 %v1494, 16
        %v1703 = vshll.u32 %v1494, 16
        %v1705 = vrot.slane %v1703, 1
        %v1706 = vor.u32 %v1701, %v1705
        %v1708 = vshll.u32 %v1574, 16
        %v1710 = vrot.slane %v1708, 1
        %v1711 = vsel %vm554, %v1706, %v1710
        %v1713 = vshrl.u32 %v1495, 16
        %v1715 = vshll.u32 %v1495, 16
        %v1717 = vrot.slane %v1715, 1
        %v1718 = vor.u32 %v1713, %v1717
        %v1720 = vshll.u32 %v1575, 16
        %v1722 = vrot.slane %v1720, 1
        %v1723 = vsel %vm554, %v1718, %v1722
        %v1725 = vshrl.u32 %v1496, 16
        %v1727 = vshll.u32 %v1496, 16
        %v1729 = vrot.slane %v1727, 1
        %v1730 = vor.u32 %v1725, %v1729
        %v1732 = vshll.u32 %v1576, 16
        %v1734 = vrot.slane %v1732, 1
        %v1735 = vsel %vm554, %v1730, %v1734
        %v1737 = vshrl.u32 %v1497, 16
        %v1739 = vshll.u32 %v1497, 16
        %v1741 = vrot.slane %v1739, 1
        %v1742 = vor.u32 %v1737, %v1741
        %v1744 = vshll.u32 %v1577, 16
        %v1746 = vrot.slane %v1744, 1
        %v1747 = vsel %vm554, %v1742, %v1746
        %v1749 = vshrl.u32 %v1498, 16
        %v1751 = vshll.u32 %v1498, 16
        %v1753 = vrot.slane %v1751, 1
        %v1754 = vor.u32 %v1749, %v1753
        %v1756 = vshll.u32 %v1578, 16
        %v1758 = vrot.slane %v1756, 1
        %v1759 = vsel %vm554, %v1754, %v1758
        %v1761 = vshrl.u32 %v1499, 16
        %v1763 = vshll.u32 %v1499, 16
        %v1765 = vrot.slane %v1763, 1
        %v1766 = vor.u32 %v1761, %v1765
        %v1768 = vshll.u32 %v1579, 16
        %v1770 = vrot.slane %v1768, 1
        %v1771 = vsel %vm554, %v1766, %v1770
        %1772 = vrot.lane.b32.xlu0 %v1591, 28
        %v1773 = vpop.permute.xlu0 %1772
        %1774 = vrot.lane.b32.xlu0 %v1603, 28
        %v1775 = vpop.permute.xlu0 %1774
        %1776 = vrot.lane.b32.xlu0 %v1615, 28
        %v1777 = vpop.permute.xlu0 %1776
        %1778 = vrot.lane.b32.xlu0 %v1627, 28
        %v1779 = vpop.permute.xlu0 %1778
        %1780 = vrot.lane.b32.xlu0 %v1639, 28
        %v1781 = vpop.permute.xlu0 %1780
        %1782 = vrot.lane.b32.xlu0 %v1651, 28
        %v1783 = vpop.permute.xlu0 %1782
        %1784 = vrot.lane.b32.xlu0 %v1663, 28
        %v1785 = vpop.permute.xlu0 %1784
        %1786 = vrot.lane.b32.xlu0 %v1675, 28
        %v1787 = vpop.permute.xlu0 %1786
        %1788 = vrot.lane.b32.xlu0 %v1687, 28
        %v1789 = vpop.permute.xlu0 %1788
        %1790 = vrot.lane.b32.xlu0 %v1699, 28
        %v1791 = vpop.permute.xlu0 %1790
        %1792 = vrot.lane.b32.xlu0 %v1711, 28
        %v1793 = vpop.permute.xlu0 %1792
        %1794 = vrot.lane.b32.xlu0 %v1723, 28
        %v1795 = vpop.permute.xlu0 %1794
        %1796 = vrot.lane.b32.xlu0 %v1735, 28
        %v1797 = vpop.permute.xlu0 %1796
        %1798 = vrot.lane.b32.xlu0 %v1747, 28
        %v1799 = vpop.permute.xlu0 %1798
        %1800 = vrot.lane.b32.xlu0 %v1759, 28
        %v1801 = vpop.permute.xlu0 %1800
        %1802 = vrot.lane.b32.xlu0 %v1771, 28
        %v1803 = vpop.permute.xlu0 %1802
        %v1820 = vunpack.c.l.b16 %v410
        %v1821 = vunpack.c.l.b16 %v411
        %v1822 = vunpack.c.l.b16 %v412
        %v1823 = vunpack.c.l.b16 %v413
        %v1824 = vunpack.c.l.b16 %v414
        %v1825 = vunpack.c.l.b16 %v415
        %v1826 = vunpack.c.l.b16 %v416
        %v1827 = vunpack.c.l.b16 %v417
        %v1828 = vunpack.c.l.b16 %v418
        %v1829 = vunpack.c.l.b16 %v419
        %v1830 = vunpack.c.l.b16 %v420
        %v1831 = vunpack.c.l.b16 %v421
        %v1832 = vunpack.c.l.b16 %v422
        %v1833 = vunpack.c.l.b16 %v423
        %v1834 = vunpack.c.l.b16 %v424
        %v1835 = vunpack.c.l.b16 %v425
        %v1836 = vpack.c.b16 %v1453, %v1820
        %v1837 = vpack.c.b16 %v1455, %v1821
        %v1838 = vpack.c.b16 %v1457, %v1822
        %v1839 = vpack.c.b16 %v1459, %v1823
        %v1840 = vpack.c.b16 %v1461, %v1824
        %v1841 = vpack.c.b16 %v1463, %v1825
        %v1842 = vpack.c.b16 %v1465, %v1826
        %v1843 = vpack.c.b16 %v1467, %v1827
        %v1844 = vpack.c.b16 %v1469, %v1828
        %v1845 = vpack.c.b16 %v1471, %v1829
        %v1846 = vpack.c.b16 %v1473, %v1830
        %v1847 = vpack.c.b16 %v1475, %v1831
        %v1848 = vpack.c.b16 %v1477, %v1832
        %v1849 = vpack.c.b16 %v1479, %v1833
        %v1850 = vpack.c.b16 %v1481, %v1834
        %v1851 = vpack.c.b16 %v1483, %v1835
        %v1852 = vrot.slane %v1836, 1
        %v1853 = vrot.slane %v1564, 1
        %v1854 = vsel %vm827, %v1852, %v1853
        %v1855 = vrot.slane %v1837, 1
        %v1856 = vrot.slane %v1565, 1
        %v1857 = vsel %vm827, %v1855, %v1856
        %v1858 = vrot.slane %v1838, 1
        %v1859 = vrot.slane %v1566, 1
        %v1860 = vsel %vm827, %v1858, %v1859
        %v1861 = vrot.slane %v1839, 1
        %v1862 = vrot.slane %v1567, 1
        %v1863 = vsel %vm827, %v1861, %v1862
        %v1864 = vrot.slane %v1840, 1
        %v1865 = vrot.slane %v1568, 1
        %v1866 = vsel %vm827, %v1864, %v1865
        %v1867 = vrot.slane %v1841, 1
        %v1868 = vrot.slane %v1569, 1
        %v1869 = vsel %vm827, %v1867, %v1868
        %v1870 = vrot.slane %v1842, 1
        %v1871 = vrot.slane %v1570, 1
        %v1872 = vsel %vm827, %v1870, %v1871
        %v1873 = vrot.slane %v1843, 1
        %v1874 = vrot.slane %v1571, 1
        %v1875 = vsel %vm827, %v1873, %v1874
        %v1876 = vrot.slane %v1844, 1
        %v1877 = vrot.slane %v1572, 1
        %v1878 = vsel %vm827, %v1876, %v1877
        %v1879 = vrot.slane %v1845, 1
        %v1880 = vrot.slane %v1573, 1
        %v1881 = vsel %vm827, %v1879, %v1880
        %v1882 = vrot.slane %v1846, 1
        %v1883 = vrot.slane %v1574, 1
        %v1884 = vsel %vm827, %v1882, %v1883
        %v1885 = vrot.slane %v1847, 1
        %v1886 = vrot.slane %v1575, 1
        %v1887 = vsel %vm827, %v1885, %v1886
        %v1888 = vrot.slane %v1848, 1
        %v1889 = vrot.slane %v1576, 1
        %v1890 = vsel %vm827, %v1888, %v1889
        %v1891 = vrot.slane %v1849, 1
        %v1892 = vrot.slane %v1577, 1
        %v1893 = vsel %vm827, %v1891, %v1892
        %v1894 = vrot.slane %v1850, 1
        %v1895 = vrot.slane %v1578, 1
        %v1896 = vsel %vm827, %v1894, %v1895
        %v1897 = vrot.slane %v1851, 1
        %v1898 = vrot.slane %v1579, 1
        %v1899 = vsel %vm827, %v1897, %v1898
        %1900 = vrot.lane.b32.xlu0 %v1854, 32
        %v1901 = vpop.permute.xlu0 %1900
        %1902 = vrot.lane.b32.xlu0 %v1857, 32
        %v1903 = vpop.permute.xlu0 %1902
        %1904 = vrot.lane.b32.xlu0 %v1860, 32
        %v1905 = vpop.permute.xlu0 %1904
        %1906 = vrot.lane.b32.xlu0 %v1863, 32
        %v1907 = vpop.permute.xlu0 %1906
        %1908 = vrot.lane.b32.xlu0 %v1866, 32
        %v1909 = vpop.permute.xlu0 %1908
        %1910 = vrot.lane.b32.xlu0 %v1869, 32
        %v1911 = vpop.permute.xlu0 %1910
        %1912 = vrot.lane.b32.xlu0 %v1872, 32
        %v1913 = vpop.permute.xlu0 %1912
        %1914 = vrot.lane.b32.xlu0 %v1875, 32
        %v1915 = vpop.permute.xlu0 %1914
        %1916 = vrot.lane.b32.xlu0 %v1878, 32
        %v1917 = vpop.permute.xlu0 %1916
        %1918 = vrot.lane.b32.xlu0 %v1881, 32
        %v1919 = vpop.permute.xlu0 %1918
        %1920 = vrot.lane.b32.xlu0 %v1884, 32
        %v1921 = vpop.permute.xlu0 %1920
        %1922 = vrot.lane.b32.xlu0 %v1887, 32
        %v1923 = vpop.permute.xlu0 %1922
        %1924 = vrot.lane.b32.xlu0 %v1890, 32
        %v1925 = vpop.permute.xlu0 %1924
        %1926 = vrot.lane.b32.xlu0 %v1893, 32
        %v1927 = vpop.permute.xlu0 %1926
        %1928 = vrot.lane.b32.xlu0 %v1896, 32
        %v1929 = vpop.permute.xlu0 %1928
        %1930 = vrot.lane.b32.xlu0 %v1899, 32
        %v1931 = vpop.permute.xlu0 %1930
        %vm1932 = vcmask 31744
        %v1934 = vsel %vm1932, %v490, %v748
        %v1936 = vsel %vm1932, %v491, %v750
        %v1938 = vsel %vm1932, %v492, %v752
        %v1940 = vsel %vm1932, %v493, %v754
        %v1942 = vsel %vm1932, %v494, %v756
        %v1944 = vsel %vm1932, %v495, %v758
        %v1946 = vsel %vm1932, %v496, %v760
        %v1948 = vsel %vm1932, %v497, %v762
        %v1950 = vsel %vm1932, %v498, %v764
        %v1952 = vsel %vm1932, %v499, %v766
        %v1954 = vsel %vm1932, %v500, %v768
        %v1956 = vsel %vm1932, %v501, %v770
        %v1958 = vsel %vm1932, %v502, %v772
        %v1960 = vsel %vm1932, %v503, %v774
        %v1962 = vsel %vm1932, %v504, %v776
        %v1964 = vsel %vm1932, %v505, %v778
        %vm1965 = vcmask 64512
        %v1967 = vsel %vm1965, %v1934, %v877
        %v1969 = vsel %vm1965, %v1936, %v879
        %v1971 = vsel %vm1965, %v1938, %v881
        %v1973 = vsel %vm1965, %v1940, %v883
        %v1975 = vsel %vm1965, %v1942, %v885
        %v1977 = vsel %vm1965, %v1944, %v887
        %v1979 = vsel %vm1965, %v1946, %v889
        %v1981 = vsel %vm1965, %v1948, %v891
        %v1983 = vsel %vm1965, %v1950, %v893
        %v1985 = vsel %vm1965, %v1952, %v895
        %v1987 = vsel %vm1965, %v1954, %v897
        %v1989 = vsel %vm1965, %v1956, %v899
        %v1991 = vsel %vm1965, %v1958, %v901
        %v1993 = vsel %vm1965, %v1960, %v903
        %v1995 = vsel %vm1965, %v1962, %v905
        %v1997 = vsel %vm1965, %v1964, %v907
        %vm1998 = vcmask 97280
        %v2000 = vsel %vm1998, %v1967, %v989
        %v2002 = vsel %vm1998, %v1969, %v991
        %v2004 = vsel %vm1998, %v1971, %v993
        %v2006 = vsel %vm1998, %v1973, %v995
        %v2008 = vsel %vm1998, %v1975, %v997
        %v2010 = vsel %vm1998, %v1977, %v999
        %v2012 = vsel %vm1998, %v1979, %v1001
        %v2014 = vsel %vm1998, %v1981, %v1003
        %v2016 = vsel %vm1998, %v1983, %v1005
        %v2018 = vsel %vm1998, %v1985, %v1007
        %v2020 = vsel %vm1998, %v1987, %v1009
        %v2022 = vsel %vm1998, %v1989, %v1011
        %v2024 = vsel %vm1998, %v1991, %v1013
        %v2026 = vsel %vm1998, %v1993, %v1015
        %v2028 = vsel %vm1998, %v1995, %v1017
        %v2030 = vsel %vm1998, %v1997, %v1019
        %vm2031 = vcmask 130048
        %v2033 = vsel %vm2031, %v2000, %v1261
        %v2035 = vsel %vm2031, %v2002, %v1263
        %v2037 = vsel %vm2031, %v2004, %v1265
        %v2039 = vsel %vm2031, %v2006, %v1267
        %v2041 = vsel %vm2031, %v2008, %v1269
        %v2043 = vsel %vm2031, %v2010, %v1271
        %v2045 = vsel %vm2031, %v2012, %v1273
        %v2047 = vsel %vm2031, %v2014, %v1275
        %v2049 = vsel %vm2031, %v2016, %v1277
        %v2051 = vsel %vm2031, %v2018, %v1279
        %v2053 = vsel %vm2031, %v2020, %v1281
        %v2055 = vsel %vm2031, %v2022, %v1283
        %v2057 = vsel %vm2031, %v2024, %v1285
        %v2059 = vsel %vm2031, %v2026, %v1287
        %v2061 = vsel %vm2031, %v2028, %v1289
        %v2063 = vsel %vm2031, %v2030, %v1291
        %vm2064 = vcmask 162816
        %v2066 = vsel %vm2064, %v2033, %v1389
        %v2068 = vsel %vm2064, %v2035, %v1391
        %v2070 = vsel %vm2064, %v2037, %v1393
        %v2072 = vsel %vm2064, %v2039, %v1395
        %v2074 = vsel %vm2064, %v2041, %v1397
        %v2076 = vsel %vm2064, %v2043, %v1399
        %v2078 = vsel %vm2064, %v2045, %v1401
        %v2080 = vsel %vm2064, %v2047, %v1403
        %v2082 = vsel %vm2064, %v2049, %v1405
        %v2084 = vsel %vm2064, %v2051, %v1407
        %v2086 = vsel %vm2064, %v2053, %v1409
        %v2088 = vsel %vm2064, %v2055, %v1411
        %v2090 = vsel %vm2064, %v2057, %v1413
        %v2092 = vsel %vm2064, %v2059, %v1415
        %v2094 = vsel %vm2064, %v2061, %v1417
        %v2096 = vsel %vm2064, %v2063, %v1419
        %vm2097 = vcmask 195584
        %v2099 = vsel %vm2097, %v2066, %v1501
        %v2101 = vsel %vm2097, %v2068, %v1503
        %v2103 = vsel %vm2097, %v2070, %v1505
        %v2105 = vsel %vm2097, %v2072, %v1507
        %v2107 = vsel %vm2097, %v2074, %v1509
        %v2109 = vsel %vm2097, %v2076, %v1511
        %v2111 = vsel %vm2097, %v2078, %v1513
        %v2113 = vsel %vm2097, %v2080, %v1515
        %v2115 = vsel %vm2097, %v2082, %v1517
        %v2117 = vsel %vm2097, %v2084, %v1519
        %v2119 = vsel %vm2097, %v2086, %v1521
        %v2121 = vsel %vm2097, %v2088, %v1523
        %v2123 = vsel %vm2097, %v2090, %v1525
        %v2125 = vsel %vm2097, %v2092, %v1527
        %v2127 = vsel %vm2097, %v2094, %v1529
        %v2129 = vsel %vm2097, %v2096, %v1531
        %vm2130 = vcmask 228352
        %v2132 = vsel %vm2130, %v2099, %v1773
        %v2134 = vsel %vm2130, %v2101, %v1775
        %v2136 = vsel %vm2130, %v2103, %v1777
        %v2138 = vsel %vm2130, %v2105, %v1779
        %v2140 = vsel %vm2130, %v2107, %v1781
        %v2142 = vsel %vm2130, %v2109, %v1783
        %v2144 = vsel %vm2130, %v2111, %v1785
        %v2146 = vsel %vm2130, %v2113, %v1787
        %v2148 = vsel %vm2130, %v2115, %v1789
        %v2150 = vsel %vm2130, %v2117, %v1791
        %v2152 = vsel %vm2130, %v2119, %v1793
        %v2154 = vsel %vm2130, %v2121, %v1795
        %v2156 = vsel %vm2130, %v2123, %v1797
        %v2158 = vsel %vm2130, %v2125, %v1799
        %v2160 = vsel %vm2130, %v2127, %v1801
        %v2162 = vsel %vm2130, %v2129, %v1803
        %vm2163 = vcmask 261120
        %v2165 = vsel %vm2163, %v2132, %v1901
        %v2167 = vsel %vm2163, %v2134, %v1903
        %v2169 = vsel %vm2163, %v2136, %v1905
        %v2171 = vsel %vm2163, %v2138, %v1907
        %v2173 = vsel %vm2163, %v2140, %v1909
        %v2175 = vsel %vm2163, %v2142, %v1911
        %v2177 = vsel %vm2163, %v2144, %v1913
        %v2179 = vsel %vm2163, %v2146, %v1915
        %v2181 = vsel %vm2163, %v2148, %v1917
        %v2183 = vsel %vm2163, %v2150, %v1919
        %v2185 = vsel %vm2163, %v2152, %v1921
        %v2187 = vsel %vm2163, %v2154, %v1923
        %v2189 = vsel %vm2163, %v2156, %v1925
        %v2191 = vsel %vm2163, %v2158, %v1927
        %v2193 = vsel %vm2163, %v2160, %v1929
        %v2195 = vsel %vm2163, %v2162, %v1931
        %v2196 = vld [vmem:[%s226] sm:$0xf]
        %v2197 = vld [vmem:[%s226 + $0x4] sm:$0xf]
        %v2198 = vld [vmem:[%s226 + $0x8] sm:$0xf]
        %v2199 = vld [vmem:[%s226 + $0xc] sm:$0xf]
        %v2200 = vld [vmem:[%s226 + $0x10] sm:$0x3]
        %v2201 = vld [vmem:[%s229] sm:$0x1]
        %v2203 = vlaneseq
        %v2204 = vshrl.u32 %v2203, 7
        %v2205 = vsub.s32 0, %v2204
        %v2206 = vrot.slane %v2201, %v2205
        %v2213 = vunpack.c.l.b16 %v2196
        %v2214 = vunpack.c.l.b16 %v2197
        %v2215 = vunpack.c.l.b16 %v2198
        %v2216 = vunpack.c.l.b16 %v2199
        %v2217 = vunpack.c.l.b16 %v2200
        %v2218 = vpack.c.b16 %v2214, %v2213
        %v2219 = vpack.c.b16 %v2216, %v2215
        %v2220 = vpack.c.b16 %v2217, %v2217
        %vm2223 = vcmask 293888
        %v2224 = vsel %vm2223, %v2165, 0
        %v2226 = vsel %vm2223, %v2167, 0
        %v2228 = vsel %vm2223, %v2169, 0
        %v2230 = vsel %vm2223, %v2171, 0
        %v2232 = vsel %vm2223, %v2173, 0
        %v2234 = vsel %vm2223, %v2175, 0
        %v2236 = vsel %vm2223, %v2177, 0
        %v2238 = vsel %vm2223, %v2179, 0
        %v2240 = vsel %vm2223, %v2181, 0
        %v2242 = vsel %vm2223, %v2183, 0
        %v2244 = vsel %vm2223, %v2185, 0
        %v2246 = vsel %vm2223, %v2187, 0
        %v2248 = vsel %vm2223, %v2189, 0
        %v2250 = vsel %vm2223, %v2191, 0
        %v2252 = vsel %vm2223, %v2193, 0
        %v2254 = vsel %vm2223, %v2195, 0
        %vm2256 = vcmask 1041408
        %v2258 = vsel %vm2256, %v2220, 0
        %2260 = vmatprep.subr.bf16.mxu0 0
        %2261 = vmatpush1.bf16.msra.mxu0 %v2218
        %2262 = vmatprep.subr.bf16.mxu0 0
        %2263 = vmatpush1.bf16.msra.mxu0 %v2219
        %2264 = vmatprep.subr.bf16.mxu0 0
        %2265 = vmatpush1.bf16.msra.mxu0 %v2258
        %2266 = vmatprep.subr.bf16.mxu0 0
        %2267 = vmatpush1.bf16.msra.mxu0 0
        %2268 = vmatprep.subr.bf16.mxu0 0
        %2269 = vmatpush1.bf16.msra.mxu0 0
        %2270 = vmatprep.subr.bf16.mxu0 0
        %2271 = vmatpush1.bf16.msra.mxu0 0
        %2272 = vmatprep.subr.bf16.mxu0 0
        %2273 = vmatpush1.bf16.msra.mxu0 0
        %2274 = vmatprep.subr.bf16.mxu0 0
        %2275 = vmatpush1.bf16.msra.mxu0 0
        %2276 = vmatprep.subr.bf16.mxu0 0
        %2277 = vmatpush1.bf16.msra.mxu0 0
        %2278 = vmatprep.subr.bf16.mxu0 0
        %2279 = vmatpush1.bf16.msra.mxu0 0
        %2280 = vmatprep.subr.bf16.mxu0 0
        %2281 = vmatpush1.bf16.msra.mxu0 0
        %2282 = vmatprep.subr.bf16.mxu0 0
        %2283 = vmatpush1.bf16.msra.mxu0 0
        %2284 = vmatprep.subr.bf16.mxu0 0
        %2285 = vmatpush1.bf16.msra.mxu0 0
        %2286 = vmatprep.subr.bf16.mxu0 0
        %2287 = vmatpush1.bf16.msra.mxu0 0
        %2288 = vmatprep.subr.bf16.mxu0 0
        %2289 = vmatpush1.bf16.msra.mxu0 0
        %2290 = vmatprep.subr.bf16.mxu0 0
        %2291 = vmatpush1.bf16.msra.mxu0 0
        %2292 = vmatprep.mubr.bf16.mxu0 0
        %2293 = vmatmul.mubr.bf16.gmra.mrb[0].mxu0 %v2224
        %v2294 = vpop.f32.mrb[0].mxu0
        %v2295 = vadd.f32 %v2206, %v2294
        %v2296 = vpop.f32.mrb[0].mxu0
        %v2297 = vpop.f32.mrb[0].mxu0
        %v2298 = vadd.f32 %v2206, %v2297
        %v2299 = vpop.f32.mrb[0].mxu0
        %2300 = vmatprep.mubr.bf16.mxu0 0
        %2301 = vmatmul.mubr.bf16.gmra.mrb[0].mxu0 %v2226
        %v2302 = vpop.f32.mrb[0].mxu0
        %v2303 = vadd.f32 %v2206, %v2302
        %v2304 = vpop.f32.mrb[0].mxu0
        %v2305 = vpop.f32.mrb[0].mxu0
        %v2306 = vadd.f32 %v2206, %v2305
        %v2307 = vpop.f32.mrb[0].mxu0
        %2308 = vmatprep.mubr.bf16.mxu0 0
        %2309 = vmatmul.mubr.bf16.gmra.mrb[0].mxu0 %v2228
        %v2310 = vpop.f32.mrb[0].mxu0
        %v2311 = vadd.f32 %v2206, %v2310
        %v2312 = vpop.f32.mrb[0].mxu0
        %v2313 = vpop.f32.mrb[0].mxu0
        %v2314 = vadd.f32 %v2206, %v2313
        %v2315 = vpop.f32.mrb[0].mxu0
        %2316 = vmatprep.mubr.bf16.mxu0 0
        %2317 = vmatmul.mubr.bf16.gmra.mrb[0].mxu0 %v2230
        %v2318 = vpop.f32.mrb[0].mxu0
        %v2319 = vadd.f32 %v2206, %v2318
        %v2320 = vpop.f32.mrb[0].mxu0
        %v2321 = vpop.f32.mrb[0].mxu0
        %v2322 = vadd.f32 %v2206, %v2321
        %v2323 = vpop.f32.mrb[0].mxu0
        %2324 = vmatprep.mubr.bf16.mxu0 0
        %2325 = vmatmul.mubr.bf16.gmra.mrb[0].mxu0 %v2232
        %v2326 = vpop.f32.mrb[0].mxu0
        %v2327 = vadd.f32 %v2206, %v2326
        %v2328 = vpop.f32.mrb[0].mxu0
        %v2329 = vpop.f32.mrb[0].mxu0
        %v2330 = vadd.f32 %v2206, %v2329
        %v2331 = vpop.f32.mrb[0].mxu0
        %2332 = vmatprep.mubr.bf16.mxu0 0
        %2333 = vmatmul.mubr.bf16.gmra.mrb[0].mxu0 %v2234
        %v2334 = vpop.f32.mrb[0].mxu0
        %v2335 = vadd.f32 %v2206, %v2334
        %v2336 = vpop.f32.mrb[0].mxu0
        %v2337 = vpop.f32.mrb[0].mxu0
        %v2338 = vadd.f32 %v2206, %v2337
        %v2339 = vpop.f32.mrb[0].mxu0
        %2340 = vmatprep.mubr.bf16.mxu0 0
        %2341 = vmatmul.mubr.bf16.gmra.mrb[0].mxu0 %v2236
        %v2342 = vpop.f32.mrb[0].mxu0
        %v2343 = vadd.f32 %v2206, %v2342
        %v2344 = vpop.f32.mrb[0].mxu0
        %v2345 = vpop.f32.mrb[0].mxu0
        %v2346 = vadd.f32 %v2206, %v2345
        %v2347 = vpop.f32.mrb[0].mxu0
        %2348 = vmatprep.mubr.bf16.mxu0 0
        %2349 = vmatmul.mubr.bf16.gmra.mrb[0].mxu0 %v2238
        %v2350 = vpop.f32.mrb[0].mxu0
        %v2351 = vadd.f32 %v2206, %v2350
        %v2352 = vpop.f32.mrb[0].mxu0
        %v2353 = vpop.f32.mrb[0].mxu0
        %v2354 = vadd.f32 %v2206, %v2353
        %v2355 = vpop.f32.mrb[0].mxu0
        %2356 = vmatprep.mubr.bf16.mxu0 0
        %2357 = vmatmul.mubr.bf16.gmra.mrb[0].mxu0 %v2240
        %v2358 = vpop.f32.mrb[0].mxu0
        %v2359 = vadd.f32 %v2206, %v2358
        %v2360 = vpop.f32.mrb[0].mxu0
        %v2361 = vpop.f32.mrb[0].mxu0
        %v2362 = vadd.f32 %v2206, %v2361
        %v2363 = vpop.f32.mrb[0].mxu0
        %2364 = vmatprep.mubr.bf16.mxu0 0
        %2365 = vmatmul.mubr.bf16.gmra.mrb[0].mxu0 %v2242
        %v2366 = vpop.f32.mrb[0].mxu0
        %v2367 = vadd.f32 %v2206, %v2366
        %v2368 = vpop.f32.mrb[0].mxu0
        %v2369 = vpop.f32.mrb[0].mxu0
        %v2370 = vadd.f32 %v2206, %v2369
        %v2371 = vpop.f32.mrb[0].mxu0
        %2372 = vmatprep.mubr.bf16.mxu0 0
        %2373 = vmatmul.mubr.bf16.gmra.mrb[0].mxu0 %v2244
        %v2374 = vpop.f32.mrb[0].mxu0
        %v2375 = vadd.f32 %v2206, %v2374
        %v2376 = vpop.f32.mrb[0].mxu0
        %v2377 = vpop.f32.mrb[0].mxu0
        %v2378 = vadd.f32 %v2206, %v2377
        %v2379 = vpop.f32.mrb[0].mxu0
        %2380 = vmatprep.mubr.bf16.mxu0 0
        %2381 = vmatmul.mubr.bf16.gmra.mrb[0].mxu0 %v2246
        %v2382 = vpop.f32.mrb[0].mxu0
        %v2383 = vadd.f32 %v2206, %v2382
        %v2384 = vpop.f32.mrb[0].mxu0
        %v2385 = vpop.f32.mrb[0].mxu0
        %v2386 = vadd.f32 %v2206, %v2385
        %v2387 = vpop.f32.mrb[0].mxu0
        %2388 = vmatprep.mubr.bf16.mxu0 0
        %2389 = vmatmul.mubr.bf16.gmra.mrb[0].mxu0 %v2248
        %v2390 = vpop.f32.mrb[0].mxu0
        %v2391 = vadd.f32 %v2206, %v2390
        %v2392 = vpop.f32.mrb[0].mxu0
        %v2393 = vpop.f32.mrb[0].mxu0
        %v2394 = vadd.f32 %v2206, %v2393
        %v2395 = vpop.f32.mrb[0].mxu0
        %2396 = vmatprep.mubr.bf16.mxu0 0
        %2397 = vmatmul.mubr.bf16.gmra.mrb[0].mxu0 %v2250
        %v2398 = vpop.f32.mrb[0].mxu0
        %v2399 = vadd.f32 %v2206, %v2398
        %v2400 = vpop.f32.mrb[0].mxu0
        %v2401 = vpop.f32.mrb[0].mxu0
        %v2402 = vadd.f32 %v2206, %v2401
        %v2403 = vpop.f32.mrb[0].mxu0
        %2404 = vmatprep.mubr.bf16.mxu0 0
        %2405 = vmatmul.mubr.bf16.gmra.mrb[0].mxu0 %v2252
        %v2406 = vpop.f32.mrb[0].mxu0
        %v2407 = vadd.f32 %v2206, %v2406
        %v2408 = vpop.f32.mrb[0].mxu0
        %v2409 = vpop.f32.mrb[0].mxu0
        %v2410 = vadd.f32 %v2206, %v2409
        %v2411 = vpop.f32.mrb[0].mxu0
        %2412 = vmatprep.mubr.bf16.mxu0 0
        %2413 = vmatmul.mubr.bf16.gmra.mrb[0].mxu0 %v2254
        %v2414 = vpop.f32.mrb[0].mxu0
        %v2415 = vadd.f32 %v2206, %v2414
        %v2416 = vpop.f32.mrb[0].mxu0
        %v2417 = vpop.f32.mrb[0].mxu0
        %v2418 = vadd.f32 %v2206, %v2417
        %v2419 = vpop.f32.mrb[0].mxu0
        %2420 = vdwg.mxu0
        %2421 = vst [vmem:[%s215] sm:$0xff] %v2295
        %2422 = vst [vmem:[%s215 + $0x8] sm:$0xff] %v2298
        %2423 = vst [vmem:[%s215 + $0x10] sm:$0xff] %v2303
        %2424 = vst [vmem:[%s215 + $0x18] sm:$0xff] %v2306
        %2425 = vst [vmem:[%s215 + $0x20] sm:$0xff] %v2311
        %2426 = vst [vmem:[%s215 + $0x28] sm:$0xff] %v2314
        %2427 = vst [vmem:[%s215 + $0x30] sm:$0xff] %v2319
        %2428 = vst [vmem:[%s215 + $0x38] sm:$0xff] %v2322
        %2429 = vst [vmem:[%s215 + $0x40] sm:$0xff] %v2327
        %2430 = vst [vmem:[%s215 + $0x48] sm:$0xff] %v2330
        %2431 = vst [vmem:[%s215 + $0x50] sm:$0xff] %v2335
        %2432 = vst [vmem:[%s215 + $0x58] sm:$0xff] %v2338
        %2433 = vst [vmem:[%s215 + $0x60] sm:$0xff] %v2343
        %2434 = vst [vmem:[%s215 + $0x68] sm:$0xff] %v2346
        %2435 = vst [vmem:[%s215 + $0x70] sm:$0xff] %v2351
        %2436 = vst [vmem:[%s215 + $0x78] sm:$0xff] %v2354
        %2437 = vst [vmem:[%s215 + $0x80] sm:$0xff] %v2359
        %2438 = vst [vmem:[%s215 + $0x88] sm:$0xff] %v2362
        %2439 = vst [vmem:[%s215 + $0x90] sm:$0xff] %v2367
        %2440 = vst [vmem:[%s215 + $0x98] sm:$0xff] %v2370
        %2441 = vst [vmem:[%s215 + $0xa0] sm:$0xff] %v2375
        %2442 = vst [vmem:[%s215 + $0xa8] sm:$0xff] %v2378
        %2443 = vst [vmem:[%s215 + $0xb0] sm:$0xff] %v2383
        %2444 = vst [vmem:[%s215 + $0xb8] sm:$0xff] %v2386
        %2445 = vst [vmem:[%s215 + $0xc0] sm:$0xff] %v2391
        %2446 = vst [vmem:[%s215 + $0xc8] sm:$0xff] %v2394
        %2447 = vst [vmem:[%s215 + $0xd0] sm:$0xff] %v2399
        %2448 = vst [vmem:[%s215 + $0xd8] sm:$0xff] %v2402
        %2449 = vst [vmem:[%s215 + $0xe0] sm:$0xff] %v2407
        %2450 = vst [vmem:[%s215 + $0xe8] sm:$0xff] %v2410
        %2451 = vst [vmem:[%s215 + $0xf0] sm:$0xff] %v2415
        %2452 = vst [vmem:[%s215 + $0xf8] sm:$0xff] %v2418
        %s2453 = sand.u32 %s128, 1
        %s2454 = scalar_lea.sflag [#allocation3], %s2453
        %s2455 = sand.u32 %s128, 1
        %s2456 = smul.addr %s2455, 256
        %s2457 = scalar_lea.vmem [#allocation2], %s2456
        // Predicated region
        $region33: #{tpu_custom_call.1} parent=31 // pred_check
          %p2458 = pneg %p138
        $region34: #{tpu_custom_call.1} parent=31 // pred_check_branch
          %2460 = sbr.rel (%p2458) target = $region36
        $region35: #{tpu_custom_call.1} parent=31 // pred_region
          %s2461 = smul.u32 16, %s24
          %s2463 = ssub.s32 4096, 4096
          %2464 = vsyncadd %s2454, %s2463
          %s2465 = smul.addr %s2461, 2
          %s2466 = sadd.s32 %s23, %s2465
          %s2467 = smul.addr %s22, 32
          %s2468 = sadd.s32 %s2466, %s2467
          %s2469 = smul.addr %s2468, 128
          %s2470 = scalar_lea.hbm %s3, %s2469
          %s2471 = sshll.u32 %s2457, 4
          %s2472 = int_to_ptr.vmem [resolvable:$true] %s2471
          %2477 = dma.vmem_to_hbm [thread:$0]  %s2472, 4096, %s2470, %s2454, 128, 128, 8
        $region36: #{tpu_custom_call.1} parent=31 // pred_fallthru
          _
      $region32: #{tpu_custom_call.1} parent=5 // pred_fallthru
        _
      %p2478 = scmp.le.s32.totalorder 2, %s12
      // Predicated region
      $region37: #{tpu_custom_call.1} parent=5 // pred_check
        %p2479 = pneg %p2478
      $region38: #{tpu_custom_call.1} parent=5 // pred_check_branch
        %2481 = sbr.rel (%p2479) target = $region40
      $region39: #{tpu_custom_call.1} parent=5 // pred_region
        %s2482 = ssub.s32 %s12, 2
        // Predicated region
        $region41: #{tpu_custom_call.1} parent=39 // pred_check
          %p2483 = pneg %p144
        $region42: #{tpu_custom_call.1} parent=39 // pred_check_branch
          %2485 = sbr.rel (%p2483) target = $region44
        $region43: #{tpu_custom_call.1} parent=39 // pred_region
          %s2486 = sand.u32 %s129, 1
          %s2487 = scalar_lea.sflag [#allocation3], %s2486
          %s2488 = sand.u32 %s129, 1
          %s2489 = smul.addr %s2488, 256
          %s2490 = scalar_lea.vmem [#allocation2], %s2489
          %2491 = dma.done %s2487, 4096
        $region44: #{tpu_custom_call.1} parent=39 // pred_fallthru
          _
      $region40: #{tpu_custom_call.1} parent=5 // pred_fallthru
        _
    $region6: #{tpu_custom_call.1} parent=1 // loop_footer
      %s16 = sadd.s32 1, %s12
    $region7: #{tpu_custom_call.1} parent=1 // loop_footer_branch
      %11 = sbr.rel target = $region3
    $region8: #{tpu_custom_call.1} parent=1 // loop_exit
      _
    %2492 = vsyncpa [#allocation3], 1
    %s2493 = scalar_lea.sflag [#allocation3], 1
    %2494 = vsyncpa %s2493, 1

</llo_original>
